<compile_context>
chip_gen: v7x
topology: tpu7x:2x2x1
jax: 0.10.0
libtpu: 0.0.40
codegen_flags: <defaults>
</compile_context>

<pallas_src>
import jax
import jax.numpy as jnp
from jax.experimental import pallas as pl
from jax.experimental.pallas import tpu as pltpu


def _round_up(x, m):
    return ((x + m - 1) // m) * m


# Model dimensions (fixed by the PyTorch module) and lane-padded versions.
IN_FEATS, HID1, HID2, OUT_FEATS = 1433, 160, 16, 6
LANE = 128
F0P = _round_up(IN_FEATS, LANE)    # 1536
F1P = _round_up(HID1, LANE)        # 256
F2P = _round_up(HID2, LANE)        # 128
F3P = _round_up(OUT_FEATS, LANE)   # 128


def fused_gcn_kernel(a_ref, h_ref, w1q_ref, s1_ref, b1_ref,
                     w2_ref, b2_ref, w3_ref, b3_ref, o_ref):
    """relu(A@(H@W1)+b1) -> relu(A@(x@W2)+b2) -> A@(x@W3)+b3, all in VMEM."""
    a = a_ref[...].astype(jnp.float32)               # (N, N), exact 0/1

    # Layer 1: W1 is int8 in HBM; int8->bf16 is exact (|q| <= 127), per-column
    # dequant scale is folded after the dot (commutes with the A aggregation).
    w1 = w1q_ref[...].astype(jnp.bfloat16)
    t = jnp.dot(h_ref[...], w1,
                preferred_element_type=jnp.float32) * s1_ref[...]
    x = jnp.dot(a, t, preferred_element_type=jnp.float32) + b1_ref[...]
    x = jnp.maximum(x, 0.0)

    # Layer 2: relu(A @ (x @ W2) + b2)  (all f32, tiles are tiny)
    t = jnp.dot(x, w2_ref[...], preferred_element_type=jnp.float32)
    x = jnp.dot(a, t, preferred_element_type=jnp.float32) + b2_ref[...]
    x = jnp.maximum(x, 0.0)

    # Layer 3 (no ReLU): A @ (x @ W3) + b3
    t = jnp.dot(x, w3_ref[...], preferred_element_type=jnp.float32)
    x = jnp.dot(a, t, preferred_element_type=jnp.float32) + b3_ref[...]

    o_ref[...] = x.astype(o_ref.dtype)


def _fused_gcn_call(a, h, p):
    """a: (B, N, N) bf16, h: (B, N, F0P) bf16, p: padded params dict."""
    bsz, n, _ = a.shape
    operands = (a, h, p["w1_q"], p["s1"], p["b1"],
                p["w2"], p["b2"], p["w3"], p["b3"])

    const = lambda b: (0, 0)          # weights: VMEM-resident across the grid
    per_graph = lambda b: (b, 0, 0)   # A / H / out: indexed by the batch axis

    flops = bsz * 2 * n * (F0P * F1P + n * F1P
                           + F1P * F2P + n * F2P
                           + F2P * F3P + n * F3P)
    weight_bytes = sum(int(p[k].size) * p[k].dtype.itemsize
                       for k in ("w1_q", "s1", "b1", "w2", "b2", "w3", "b3"))
    bytes_accessed = (weight_bytes
                      + int(a.size) * a.dtype.itemsize
                      + int(h.size) * h.dtype.itemsize
                      + bsz * n * F3P * 2)

    return pl.pallas_call(
        fused_gcn_kernel,
        out_shape=jax.ShapeDtypeStruct((bsz, n, F3P), jnp.bfloat16),
        grid=(bsz,),
        in_specs=[
            pl.BlockSpec((None, n, n), per_graph),        # A   (per graph)
            pl.BlockSpec((None, n, F0P), per_graph),      # H   (per graph)
            pl.BlockSpec((F0P, F1P), const),              # W1 int8 (resident)
            pl.BlockSpec((1, F1P), const),                # W1 scales
            pl.BlockSpec((1, F1P), const),                # b1
            pl.BlockSpec((F1P, F2P), const),              # W2
            pl.BlockSpec((1, F2P), const),                # b2
            pl.BlockSpec((F2P, F3P), const),              # W3
            pl.BlockSpec((1, F3P), const),                # b3
        ],
        out_specs=pl.BlockSpec((None, n, F3P), per_graph),
        compiler_params=pltpu.CompilerParams(
            dimension_semantics=("parallel",)),           # v7x: 2 TCs split B
        cost_estimate=pl.CostEstimate(flops=int(flops), transcendentals=0,
                                      bytes_accessed=int(bytes_accessed)),
    )(*operands)


@jax.jit
def net_forward(a_p, h_p, params_p):
    """Fused 3-layer GCN forward over a batch of pre-padded graphs."""
    out_p = _fused_gcn_call(a_p, h_p, params_p)
    return out_p[:, :, :OUT_FEATS]


def init_params(key):
    """Deterministic nn.Linear-style init: U(-1/sqrt(fan_in), 1/sqrt(fan_in))."""
    dims = [(IN_FEATS, HID1), (HID1, HID2), (HID2, OUT_FEATS)]
    params = {}
    for idx, (f_in, f_out) in enumerate(dims, start=1):
        key, kw, kb = jax.random.split(key, 3)
        bound = 1.0 / jnp.sqrt(jnp.float32(f_in))
        params[f"w{idx}"] = jax.random.uniform(
            kw, (f_in, f_out), jnp.float32, -bound, bound)
        params[f"b{idx}"] = jax.random.uniform(
            kb, (f_out,), jnp.float32, -bound, bound)
    return params


def prepare_params(params):
    """One-time prep: int8-quantize W1 (per-out-column scales), pad everything."""
    prepped = {}

    # --- W1: int8 + per-output-column f32 scales (dominant HBM traffic) ---
    w1 = params["w1"]                                     # (1433, 160) f32
    scale = jnp.max(jnp.abs(w1), axis=0) / 127.0          # (160,)
    scale = jnp.maximum(scale, 1e-8)
    w1_q = jnp.clip(jnp.round(w1 / scale), -127.0, 127.0).astype(jnp.int8)
    prepped["w1_q"] = jnp.pad(
        w1_q, ((0, F0P - IN_FEATS), (0, F1P - HID1)))     # (1536, 256) int8
    prepped["s1"] = jnp.pad(
        scale, ((0, F1P - HID1),)).reshape(1, F1P).astype(jnp.float32)
    prepped["b1"] = jnp.pad(
        params["b1"], ((0, F1P - HID1),)).reshape(1, F1P).astype(jnp.float32)

    # --- W2 / W3: tiny, keep f32 ---
    prepped["w2"] = jnp.pad(
        params["w2"], ((0, F1P - HID1), (0, F2P - HID2))).astype(jnp.float32)
    prepped["b2"] = jnp.pad(
        params["b2"], ((0, F2P - HID2),)).reshape(1, F2P).astype(jnp.float32)
    prepped["w3"] = jnp.pad(
        params["w3"], ((0, F2P - HID2), (0, F3P - OUT_FEATS))).astype(jnp.float32)
    prepped["b3"] = jnp.pad(
        params["b3"], ((0, F3P - OUT_FEATS),)).reshape(1, F3P).astype(jnp.float32)
    return prepped


def prepare_inputs(adj, features):
    """Cast adjacency to bf16 (lossless, 0/1) and pad/cast features (once)."""
    a_p = adj.astype(jnp.bfloat16)                        # (B, N, N)
    h_p = jnp.pad(features,
                  ((0, 0), (0, 0),
                   (0, F0P - features.shape[-1]))).astype(jnp.bfloat16)
    return a_p, h_p


def net_reference(a, h, params):
    """Pure-JAX reference of the PyTorch module's forward (f32 math), batched."""
    def one(a_i, h_i):
        x = jnp.maximum(a_i @ h_i @ params["w1"] + params["b1"], 0.0)
        x = jnp.maximum(a_i @ x @ params["w2"] + params["b2"], 0.0)
        return a_i @ x @ params["w3"] + params["b3"]
    return jax.vmap(one)(a, h)


if __name__ == "__main__":
    key = jax.random.PRNGKey(0)
    k_feat, k_adj, k_params = jax.random.split(key, 3)

    B, N = 4, 64  # small batch of graphs / node count; feat dims fixed by module

    features = jax.random.normal(k_feat, (B, N, IN_FEATS), jnp.float32)
    # Random directed graphs with self-loops; A[i, j] = 1 iff edge j -> i.
    adj = (jax.random.uniform(k_adj, (B, N, N)) < 0.1).astype(jnp.float32)
    adj = jnp.maximum(adj, jnp.eye(N, dtype=jnp.float32)[None])

    params = init_params(k_params)

    # One-time prep: quantize + pad + cast (outside the per-forward path).
    params_p = prepare_params(params)
    a_p, h_p = prepare_inputs(adj, features)

    out = net_forward(a_p, h_p, params_p)
    jax.block_until_ready(out)
    assert out.shape == (B, N, OUT_FEATS), out.shape

    # Sanity check vs f32 reference (bf16 inputs + int8 W1 -> loose tolerance).
    ref = net_reference(adj, features, params)
    out_f32 = out.astype(jnp.float32)
    max_err = float(jnp.max(jnp.abs(out_f32 - ref)))
    scale = float(jnp.max(jnp.abs(ref))) + 1e-6
    assert max_err / scale < 0.05, (max_err, scale)

    print("KERNEL_OK")
</pallas_src>

<mosaic_0001>
module attributes {stable_mosaic.version = 11 : i64} {
  func.func @fused_gcn_kernel(%arg0: i32, %arg1: memref<1x64x64xbf16, #tpu.memory_space<vmem>>, %arg2: memref<1x64x1536xbf16, #tpu.memory_space<vmem>>, %arg3: memref<1536x256xi8, #tpu.memory_space<vmem>>, %arg4: memref<1x256xf32, #tpu.memory_space<vmem>>, %arg5: memref<1x256xf32, #tpu.memory_space<vmem>>, %arg6: memref<256x128xf32, #tpu.memory_space<vmem>>, %arg7: memref<1x128xf32, #tpu.memory_space<vmem>>, %arg8: memref<128x128xf32, #tpu.memory_space<vmem>>, %arg9: memref<1x128xf32, #tpu.memory_space<vmem>>, %arg10: memref<1x64x128xbf16, #tpu.memory_space<vmem>>) attributes {dimension_semantics = [#tpu.dimension_semantics<parallel>], iteration_bounds = array<i64: 4>, scalar_prefetch = 0 : i64, scratch_operands = 0 : i64, tpu.core_type = #tpu.core_type<tc>, window_params = [{transform_indices = @transform_0, window_bounds = array<i64: 1, 64, 64>}, {transform_indices = @transform_1, window_bounds = array<i64: 1, 64, 1536>}, {pipeline_mode = #tpu.pipeline_mode<synchronous>, transform_indices = @transform_2, window_bounds = array<i64: 1536, 256>}, {pipeline_mode = #tpu.pipeline_mode<synchronous>, transform_indices = @transform_3, window_bounds = array<i64: 1, 256>}, {pipeline_mode = #tpu.pipeline_mode<synchronous>, transform_indices = @transform_4, window_bounds = array<i64: 1, 256>}, {pipeline_mode = #tpu.pipeline_mode<synchronous>, transform_indices = @transform_5, window_bounds = array<i64: 256, 128>}, {pipeline_mode = #tpu.pipeline_mode<synchronous>, transform_indices = @transform_6, window_bounds = array<i64: 1, 128>}, {pipeline_mode = #tpu.pipeline_mode<synchronous>, transform_indices = @transform_7, window_bounds = array<i64: 128, 128>}, {pipeline_mode = #tpu.pipeline_mode<synchronous>, transform_indices = @transform_8, window_bounds = array<i64: 1, 128>}, {transform_indices = @transform_9, window_bounds = array<i64: 1, 64, 128>}]} {
    %c0 = arith.constant 0 : index
    %c0_0 = arith.constant 0 : index
    %c0_1 = arith.constant 0 : index
    %0 = vector.load %arg1[%c0, %c0_0, %c0_1] : memref<1x64x64xbf16, #tpu.memory_space<vmem>>, vector<1x64x64xbf16>
    %1 = vector.shape_cast %0 : vector<1x64x64xbf16> to vector<64x64xbf16>
    %2 = arith.extf %1 : vector<64x64xbf16> to vector<64x64xf32>
    %c0_2 = arith.constant 0 : index
    %c0_3 = arith.constant 0 : index
    %3 = vector.load %arg3[%c0_2, %c0_3] : memref<1536x256xi8, #tpu.memory_space<vmem>>, vector<1536x256xi8>
    %4 = arith.sitofp %3 : vector<1536x256xi8> to vector<1536x256xbf16>
    %c0_4 = arith.constant 0 : index
    %c0_5 = arith.constant 0 : index
    %c0_6 = arith.constant 0 : index
    %5 = vector.load %arg2[%c0_4, %c0_5, %c0_6] : memref<1x64x1536xbf16, #tpu.memory_space<vmem>>, vector<1x64x1536xbf16>
    %6 = vector.shape_cast %5 : vector<1x64x1536xbf16> to vector<64x1536xbf16>
    %cst = arith.constant dense<0.000000e+00> : vector<64x256xf32>
    %7 = tpu.matmul %6, %4, %cst {dimension_numbers = #tpu.dot_dimension_numbers<[1], [0], [0], [1], [0, 0, 1, 1], [], []>} : vector<64x1536xbf16>, vector<1536x256xbf16>, vector<64x256xf32> -> vector<64x256xf32>
    %c0_7 = arith.constant 0 : index
    %c0_8 = arith.constant 0 : index
    %8 = vector.load %arg4[%c0_7, %c0_8] : memref<1x256xf32, #tpu.memory_space<vmem>>, vector<1x256xf32>
    %9 = vector.broadcast %8 : vector<1x256xf32> to vector<64x256xf32>
    %10 = arith.mulf %7, %9 : vector<64x256xf32>
    %cst_9 = arith.constant dense<0.000000e+00> : vector<64x256xf32>
    %11 = tpu.matmul %2, %10, %cst_9 {dimension_numbers = #tpu.dot_dimension_numbers<[1], [0], [0], [1], [0, 0, 1, 1], [], []>} : vector<64x64xf32>, vector<64x256xf32>, vector<64x256xf32> -> vector<64x256xf32>
    %c0_10 = arith.constant 0 : index
    %c0_11 = arith.constant 0 : index
    %12 = vector.load %arg5[%c0_10, %c0_11] : memref<1x256xf32, #tpu.memory_space<vmem>>, vector<1x256xf32>
    %13 = vector.broadcast %12 : vector<1x256xf32> to vector<64x256xf32>
    %14 = arith.addf %11, %13 : vector<64x256xf32>
    %cst_12 = arith.constant 0.000000e+00 : f32
    %15 = vector.broadcast %cst_12 : f32 to vector<64x256xf32>
    %16 = arith.maximumf %14, %15 : vector<64x256xf32>
    %c0_13 = arith.constant 0 : index
    %c0_14 = arith.constant 0 : index
    %17 = vector.load %arg6[%c0_13, %c0_14] : memref<256x128xf32, #tpu.memory_space<vmem>>, vector<256x128xf32>
    %cst_15 = arith.constant dense<0.000000e+00> : vector<64x128xf32>
    %18 = tpu.matmul %16, %17, %cst_15 {dimension_numbers = #tpu.dot_dimension_numbers<[1], [0], [0], [1], [0, 0, 1, 1], [], []>} : vector<64x256xf32>, vector<256x128xf32>, vector<64x128xf32> -> vector<64x128xf32>
    %cst_16 = arith.constant dense<0.000000e+00> : vector<64x128xf32>
    %19 = tpu.matmul %2, %18, %cst_16 {dimension_numbers = #tpu.dot_dimension_numbers<[1], [0], [0], [1], [0, 0, 1, 1], [], []>} : vector<64x64xf32>, vector<64x128xf32>, vector<64x128xf32> -> vector<64x128xf32>
    %c0_17 = arith.constant 0 : index
    %c0_18 = arith.constant 0 : index
    %20 = vector.load %arg7[%c0_17, %c0_18] : memref<1x128xf32, #tpu.memory_space<vmem>>, vector<1x128xf32>
    %21 = vector.broadcast %20 : vector<1x128xf32> to vector<64x128xf32>
    %22 = arith.addf %19, %21 : vector<64x128xf32>
    %cst_19 = arith.constant 0.000000e+00 : f32
    %23 = vector.broadcast %cst_19 : f32 to vector<64x128xf32>
    %24 = arith.maximumf %22, %23 : vector<64x128xf32>
    %c0_20 = arith.constant 0 : index
    %c0_21 = arith.constant 0 : index
    %25 = vector.load %arg8[%c0_20, %c0_21] : memref<128x128xf32, #tpu.memory_space<vmem>>, vector<128x128xf32>
    %cst_22 = arith.constant dense<0.000000e+00> : vector<64x128xf32>
    %26 = tpu.matmul %24, %25, %cst_22 {dimension_numbers = #tpu.dot_dimension_numbers<[1], [0], [0], [1], [0, 0, 1, 1], [], []>} : vector<64x128xf32>, vector<128x128xf32>, vector<64x128xf32> -> vector<64x128xf32>
    %cst_23 = arith.constant dense<0.000000e+00> : vector<64x128xf32>
    %27 = tpu.matmul %2, %26, %cst_23 {dimension_numbers = #tpu.dot_dimension_numbers<[1], [0], [0], [1], [0, 0, 1, 1], [], []>} : vector<64x64xf32>, vector<64x128xf32>, vector<64x128xf32> -> vector<64x128xf32>
    %c0_24 = arith.constant 0 : index
    %c0_25 = arith.constant 0 : index
    %28 = vector.load %arg9[%c0_24, %c0_25] : memref<1x128xf32, #tpu.memory_space<vmem>>, vector<1x128xf32>
    %29 = vector.broadcast %28 : vector<1x128xf32> to vector<64x128xf32>
    %30 = arith.addf %27, %29 : vector<64x128xf32>
    %31 = arith.truncf %30 : vector<64x128xf32> to vector<64x128xbf16>
    %c0_26 = arith.constant 0 : index
    %c0_27 = arith.constant 0 : index
    %c0_28 = arith.constant 0 : index
    %32 = vector.load %arg10[%c0_26, %c0_27, %c0_28] : memref<1x64x128xbf16, #tpu.memory_space<vmem>>, vector<1x64x128xbf16>
    %33 = vector.shape_cast %32 : vector<1x64x128xbf16> to vector<64x128xbf16>
    %34 = vector.shape_cast %31 : vector<64x128xbf16> to vector<1x64x128xbf16>
    tpu.vector_store %arg10[%c0_26, %c0_27, %c0_28], %34 {strides = array<i32>} : memref<1x64x128xbf16, #tpu.memory_space<vmem>>, vector<1x64x128xbf16>,
    return
  }
  func.func @transform_0(%arg0: i32) -> (i32, i32, i32) {
    %c0_i32 = arith.constant 0 : i32
    %c0_i32_0 = arith.constant 0 : i32
    %c0_i32_1 = arith.constant 0 : i32
    return %arg0, %c0_i32, %c0_i32_0 : i32, i32, i32
  }
  func.func @transform_1(%arg0: i32) -> (i32, i32, i32) {
    %c0_i32 = arith.constant 0 : i32
    %c0_i32_0 = arith.constant 0 : i32
    %c0_i32_1 = arith.constant 0 : i32
    return %arg0, %c0_i32, %c0_i32_0 : i32, i32, i32
  }
  func.func @transform_2(%arg0: i32) -> (i32, i32) {
    %c0_i32 = arith.constant 0 : i32
    %c0_i32_0 = arith.constant 0 : i32
    %c0_i32_1 = arith.constant 0 : i32
    return %c0_i32, %c0_i32_0 : i32, i32
  }
  func.func @transform_3(%arg0: i32) -> (i32, i32) {
    %c0_i32 = arith.constant 0 : i32
    %c0_i32_0 = arith.constant 0 : i32
    %c0_i32_1 = arith.constant 0 : i32
    return %c0_i32, %c0_i32_0 : i32, i32
  }
  func.func @transform_4(%arg0: i32) -> (i32, i32) {
    %c0_i32 = arith.constant 0 : i32
    %c0_i32_0 = arith.constant 0 : i32
    %c0_i32_1 = arith.constant 0 : i32
    return %c0_i32, %c0_i32_0 : i32, i32
  }
  func.func @transform_5(%arg0: i32) -> (i32, i32) {
    %c0_i32 = arith.constant 0 : i32
    %c0_i32_0 = arith.constant 0 : i32
    %c0_i32_1 = arith.constant 0 : i32
    return %c0_i32, %c0_i32_0 : i32, i32
  }
  func.func @transform_6(%arg0: i32) -> (i32, i32) {
    %c0_i32 = arith.constant 0 : i32
    %c0_i32_0 = arith.constant 0 : i32
    %c0_i32_1 = arith.constant 0 : i32
    return %c0_i32, %c0_i32_0 : i32, i32
  }
  func.func @transform_7(%arg0: i32) -> (i32, i32) {
    %c0_i32 = arith.constant 0 : i32
    %c0_i32_0 = arith.constant 0 : i32
    %c0_i32_1 = arith.constant 0 : i32
    return %c0_i32, %c0_i32_0 : i32, i32
  }
  func.func @transform_8(%arg0: i32) -> (i32, i32) {
    %c0_i32 = arith.constant 0 : i32
    %c0_i32_0 = arith.constant 0 : i32
    %c0_i32_1 = arith.constant 0 : i32
    return %c0_i32, %c0_i32_0 : i32, i32
  }
  func.func @transform_9(%arg0: i32) -> (i32, i32, i32) {
    %c0_i32 = arith.constant 0 : i32
    %c0_i32_0 = arith.constant 0 : i32
    %c0_i32_1 = arith.constant 0 : i32
    return %arg0, %c0_i32, %c0_i32_0 : i32, i32, i32
  }
}

</mosaic_0001>

<llo_original>
// kernel: net_forward.1
$region0: #{net_forward.1}
  #allocation0 [shape = 'u32[]', space=smem, size = 0x4, offset = 0x4, fixed_abs, tag = 'smem constant byte address 0x4 - core index']
  #allocation1 [shape = 'u32[144,128]{1,0:T(1,128)}', space=vmem, size = 0x12000, scoped, tag = 'internal scratch']
  %s0 = inlined_call_operand.hbm [shape: bf16[4,64,64], index: 0, kind: input, shape index: {}]
  %s1 = inlined_call_operand.hbm [shape: bf16[4,64,1536], index: 1, kind: input, shape index: {}]
  %s2 = inlined_call_operand.hbm [shape: s8[1536,256], index: 2, kind: input, shape index: {}]
  %s3 = inlined_call_operand.vmem [shape: f32[1,256], index: 3, kind: input, shape index: {}]
  %s4 = inlined_call_operand.vmem [shape: f32[1,256], index: 4, kind: input, shape index: {}]
  %s5 = inlined_call_operand.hbm [shape: f32[256,128], index: 5, kind: input, shape index: {}]
  %s6 = inlined_call_operand.vmem [shape: f32[1,128], index: 6, kind: input, shape index: {}]
  %s7 = inlined_call_operand.hbm [shape: f32[128,128], index: 7, kind: input, shape index: {}]
  %s8 = inlined_call_operand.vmem [shape: f32[1,128], index: 8, kind: input, shape index: {}]
  %s9 = inlined_call_operand.vmem [shape: bf16[4,64,128], index: 9, kind: output, shape index: {}]
  %s10 = sld [smem:[#allocation0]]
  $region89: #{net_forward.1} parent=0
    _
  %s12 = ssub.s32 1, %s10
  %s13 = scalar_select 0, %s12, %s10
  $region1: #{net_forward.1} parent=0
    #allocation2 [shape = 'u8[32768]{0}', space=vmem, size = 0x8000, scoped, tag = 'input window, operand 0']
    #allocation3 [shape = 's32[2]{0}', space=sflag, size = 0x8, scoped, tag = 'scoped memory for net_forward.1']
    #allocation4 [shape = 'u8[393216]{0}', space=vmem, size = 0x60000, scoped, tag = 'input window, operand 1']
    #allocation5 [shape = 's32[2]{0}', space=sflag, size = 0x8, scoped, tag = 'scoped memory for net_forward.1']
    #allocation6 [shape = 'u8[393216]{0}', space=vmem, size = 0x60000, scoped, tag = 'input window, operand 2, single buffered']
    #allocation7 [shape = 'u8[131072]{0}', space=vmem, size = 0x20000, scoped, tag = 'input window, operand 5, single buffered']
    #allocation8 [shape = 's32[1]{0}', space=sflag, size = 0x4, scoped, tag = 'scoped memory for net_forward.1']
    #allocation9 [shape = 'u8[65536]{0}', space=vmem, size = 0x10000, scoped, tag = 'input window, operand 7, single buffered']
    %14 = vsyncpa [#allocation3], 0
    %s15 = scalar_lea.sflag [#allocation3], 1
    %16 = vsyncpa %s15, 0
    %17 = vsyncpa [#allocation5], 0
    %s18 = scalar_lea.sflag [#allocation5], 1
    %19 = vsyncpa %s18, 0
    %20 = vsyncpa [#allocation8], 0
    loop: start=0, step=1, limit=6
    $region2: #{net_forward.1} parent=1 // loop_pre_header
      _
    $region3: #{net_forward.1} parent=1 // loop_header
      %s22 = sphi 0, %s26
      %p23 = scmp.ge.s32.totalorder %s22, 6
      %s32 = sphi 0, %s34
      %s35 = sphi 0, %s32
      %s36 = sphi 0, %s35
      %s52 = sphi 0, %s36
      %s58 = sphi 0, %s60
      %s61 = sphi 0, %s58
      %s62 = sphi 0, %s61
      %s78 = sphi 0, %s62
      %s82 = sphi 0, %s82
      %s84 = sphi 0, %s82
      %s85 = sphi 0, %s84
      %s99 = sphi 0, %s85
      %s103 = sphi 0, %s103
      %s105 = sphi 0, %s103
      %s106 = sphi 0, %s105
      %s120 = sphi 0, %s106
      %s124 = sphi 0, %s124
      %s126 = sphi 0, %s124
      %s127 = sphi 0, %s126
      %s141 = sphi 0, %s127
      %s145 = sphi 0, %s145
      %s147 = sphi 0, %s145
      %s148 = sphi 0, %s147
      %s162 = sphi 0, %s148
      %s166 = sphi 0, %s166
      %s168 = sphi 0, %s166
      %s169 = sphi 0, %s168
      %s183 = sphi 0, %s169
      %s187 = sphi 0, %s187
      %s189 = sphi 0, %s187
      %s190 = sphi 0, %s189
      %s204 = sphi 0, %s190
      %s208 = sphi 0, %s208
      %s210 = sphi 0, %s208
      %s211 = sphi 0, %s210
      %s225 = sphi 0, %s211
      %s231 = sphi 0, %s233
      %s234 = sphi 0, %s231
      %s235 = sphi 0, %s234
      %s251 = sphi 0, %s235
    $region4: #{net_forward.1} parent=1 // loop_header_branch
      %25 = sbr.rel (%p23) target = $region8
    $region5: #{net_forward.1} parent=1 // loop_body
      %s27 = ssub.s32 %s22, 1
      %s28 = ssub.s32 %s22, 2
      %s29 = sadd.s32 %s22, 1
      %s30 = ssub.s32 %s22, %s29
      %p31 = scmp.eq.s32.totalorder %s30, 0
      %s33 = sadd.s32 %s32, 1
      %s34 = scalar_select %p31, %s32, %s33
      %p37 = pneg %p31
      %p38 = scmp.eq.s32.totalorder %s22, 3
      %p39 = por %p37, %p38
      %p40 = scmp.ne.s32.totalorder %s32, %s35
      %p41 = scmp.eq.s32.totalorder %s22, 0
      %p42 = por %p40, %p41
      %p43 = scmp.ne.s32.totalorder %s32, %s35
      %p44 = scmp.eq.s32.totalorder %s27, 3
      %p45 = por %p43, %p44
      %p46 = scmp.ne.s32.totalorder %s35, %s36
      %p47 = scmp.eq.s32.totalorder %s27, 0
      %p48 = por %p46, %p47
      %p49 = scmp.ne.s32.totalorder %s35, %s36
      %p50 = scmp.eq.s32.totalorder %s28, 3
      %p51 = por %p49, %p50
      %p53 = scmp.ne.s32.totalorder %s36, %s52
      %p54 = scmp.eq.s32.totalorder %s28, 0
      %p55 = por %p53, %p54
      %s56 = ssub.s32 %s22, %s29
      %p57 = scmp.eq.s32.totalorder %s56, 0
      %s59 = sadd.s32 %s58, 1
      %s60 = scalar_select %p57, %s58, %s59
      %p63 = pneg %p57
      %p64 = scmp.eq.s32.totalorder %s22, 3
      %p65 = por %p63, %p64
      %p66 = scmp.ne.s32.totalorder %s58, %s61
      %p67 = scmp.eq.s32.totalorder %s22, 0
      %p68 = por %p66, %p67
      %p69 = scmp.ne.s32.totalorder %s58, %s61
      %p70 = scmp.eq.s32.totalorder %s27, 3
      %p71 = por %p69, %p70
      %p72 = scmp.ne.s32.totalorder %s61, %s62
      %p73 = scmp.eq.s32.totalorder %s27, 0
      %p74 = por %p72, %p73
      %p75 = scmp.ne.s32.totalorder %s61, %s62
      %p76 = scmp.eq.s32.totalorder %s28, 3
      %p77 = por %p75, %p76
      %p79 = scmp.ne.s32.totalorder %s62, %s78
      %p80 = scmp.eq.s32.totalorder %s28, 0
      %p81 = por %p79, %p80
      %s83 = sadd.s32 %s82, 1
      %p86 = scmp.eq.s32.totalorder %s22, 3
      %p87 = scmp.ne.s32.totalorder %s82, %s84
      %p88 = scmp.eq.s32.totalorder %s22, 0
      %p89 = por %p87, %p88
      %p90 = scmp.ne.s32.totalorder %s82, %s84
      %p91 = scmp.eq.s32.totalorder %s27, 3
      %p92 = por %p90, %p91
      %p93 = scmp.ne.s32.totalorder %s84, %s85
      %p94 = scmp.eq.s32.totalorder %s27, 0
      %p95 = por %p93, %p94
      %p96 = scmp.ne.s32.totalorder %s84, %s85
      %p97 = scmp.eq.s32.totalorder %s28, 3
      %p98 = por %p96, %p97
      %p100 = scmp.ne.s32.totalorder %s85, %s99
      %p101 = scmp.eq.s32.totalorder %s28, 0
      %p102 = por %p100, %p101
      %s104 = sadd.s32 %s103, 1
      %p107 = scmp.eq.s32.totalorder %s22, 3
      %p108 = scmp.ne.s32.totalorder %s103, %s105
      %p109 = scmp.eq.s32.totalorder %s22, 0
      %p110 = por %p108, %p109
      %p111 = scmp.ne.s32.totalorder %s103, %s105
      %p112 = scmp.eq.s32.totalorder %s27, 3
      %p113 = por %p111, %p112
      %p114 = scmp.ne.s32.totalorder %s105, %s106
      %p115 = scmp.eq.s32.totalorder %s27, 0
      %p116 = por %p114, %p115
      %p117 = scmp.ne.s32.totalorder %s105, %s106
      %p118 = scmp.eq.s32.totalorder %s28, 3
      %p119 = por %p117, %p118
      %p121 = scmp.ne.s32.totalorder %s106, %s120
      %p122 = scmp.eq.s32.totalorder %s28, 0
      %p123 = por %p121, %p122
      %s125 = sadd.s32 %s124, 1
      %p128 = scmp.eq.s32.totalorder %s22, 3
      %p129 = scmp.ne.s32.totalorder %s124, %s126
      %p130 = scmp.eq.s32.totalorder %s22, 0
      %p131 = por %p129, %p130
      %p132 = scmp.ne.s32.totalorder %s124, %s126
      %p133 = scmp.eq.s32.totalorder %s27, 3
      %p134 = por %p132, %p133
      %p135 = scmp.ne.s32.totalorder %s126, %s127
      %p136 = scmp.eq.s32.totalorder %s27, 0
      %p137 = por %p135, %p136
      %p138 = scmp.ne.s32.totalorder %s126, %s127
      %p139 = scmp.eq.s32.totalorder %s28, 3
      %p140 = por %p138, %p139
      %p142 = scmp.ne.s32.totalorder %s127, %s141
      %p143 = scmp.eq.s32.totalorder %s28, 0
      %p144 = por %p142, %p143
      %s146 = sadd.s32 %s145, 1
      %p149 = scmp.eq.s32.totalorder %s22, 3
      %p150 = scmp.ne.s32.totalorder %s145, %s147
      %p151 = scmp.eq.s32.totalorder %s22, 0
      %p152 = por %p150, %p151
      %p153 = scmp.ne.s32.totalorder %s145, %s147
      %p154 = scmp.eq.s32.totalorder %s27, 3
      %p155 = por %p153, %p154
      %p156 = scmp.ne.s32.totalorder %s147, %s148
      %p157 = scmp.eq.s32.totalorder %s27, 0
      %p158 = por %p156, %p157
      %p159 = scmp.ne.s32.totalorder %s147, %s148
      %p160 = scmp.eq.s32.totalorder %s28, 3
      %p161 = por %p159, %p160
      %p163 = scmp.ne.s32.totalorder %s148, %s162
      %p164 = scmp.eq.s32.totalorder %s28, 0
      %p165 = por %p163, %p164
      %s167 = sadd.s32 %s166, 1
      %p170 = scmp.eq.s32.totalorder %s22, 3
      %p171 = scmp.ne.s32.totalorder %s166, %s168
      %p172 = scmp.eq.s32.totalorder %s22, 0
      %p173 = por %p171, %p172
      %p174 = scmp.ne.s32.totalorder %s166, %s168
      %p175 = scmp.eq.s32.totalorder %s27, 3
      %p176 = por %p174, %p175
      %p177 = scmp.ne.s32.totalorder %s168, %s169
      %p178 = scmp.eq.s32.totalorder %s27, 0
      %p179 = por %p177, %p178
      %p180 = scmp.ne.s32.totalorder %s168, %s169
      %p181 = scmp.eq.s32.totalorder %s28, 3
      %p182 = por %p180, %p181
      %p184 = scmp.ne.s32.totalorder %s169, %s183
      %p185 = scmp.eq.s32.totalorder %s28, 0
      %p186 = por %p184, %p185
      %s188 = sadd.s32 %s187, 1
      %p191 = scmp.eq.s32.totalorder %s22, 3
      %p192 = scmp.ne.s32.totalorder %s187, %s189
      %p193 = scmp.eq.s32.totalorder %s22, 0
      %p194 = por %p192, %p193
      %p195 = scmp.ne.s32.totalorder %s187, %s189
      %p196 = scmp.eq.s32.totalorder %s27, 3
      %p197 = por %p195, %p196
      %p198 = scmp.ne.s32.totalorder %s189, %s190
      %p199 = scmp.eq.s32.totalorder %s27, 0
      %p200 = por %p198, %p199
      %p201 = scmp.ne.s32.totalorder %s189, %s190
      %p202 = scmp.eq.s32.totalorder %s28, 3
      %p203 = por %p201, %p202
      %p205 = scmp.ne.s32.totalorder %s190, %s204
      %p206 = scmp.eq.s32.totalorder %s28, 0
      %p207 = por %p205, %p206
      %s209 = sadd.s32 %s208, 1
      %p212 = scmp.eq.s32.totalorder %s22, 3
      %p213 = scmp.ne.s32.totalorder %s208, %s210
      %p214 = scmp.eq.s32.totalorder %s22, 0
      %p215 = por %p213, %p214
      %p216 = scmp.ne.s32.totalorder %s208, %s210
      %p217 = scmp.eq.s32.totalorder %s27, 3
      %p218 = por %p216, %p217
      %p219 = scmp.ne.s32.totalorder %s210, %s211
      %p220 = scmp.eq.s32.totalorder %s27, 0
      %p221 = por %p219, %p220
      %p222 = scmp.ne.s32.totalorder %s210, %s211
      %p223 = scmp.eq.s32.totalorder %s28, 3
      %p224 = por %p222, %p223
      %p226 = scmp.ne.s32.totalorder %s211, %s225
      %p227 = scmp.eq.s32.totalorder %s28, 0
      %p228 = por %p226, %p227
      %s229 = ssub.s32 %s22, %s29
      %p230 = scmp.eq.s32.totalorder %s229, 0
      %s232 = sadd.s32 %s231, 1
      %s233 = scalar_select %p230, %s231, %s232
      %p236 = pneg %p230
      %p237 = scmp.eq.s32.totalorder %s22, 3
      %p238 = por %p236, %p237
      %p239 = scmp.ne.s32.totalorder %s231, %s234
      %p240 = scmp.eq.s32.totalorder %s22, 0
      %p241 = por %p239, %p240
      %p242 = scmp.ne.s32.totalorder %s231, %s234
      %p243 = scmp.eq.s32.totalorder %s27, 3
      %p244 = por %p242, %p243
      %p245 = scmp.ne.s32.totalorder %s234, %s235
      %p246 = scmp.eq.s32.totalorder %s27, 0
      %p247 = por %p245, %p246
      %p248 = scmp.ne.s32.totalorder %s234, %s235
      %p249 = scmp.eq.s32.totalorder %s28, 3
      %p250 = por %p248, %p249
      %p252 = scmp.ne.s32.totalorder %s235, %s251
      %p253 = scmp.eq.s32.totalorder %s28, 0
      %p254 = por %p252, %p253
      %p255 = scmp.le.s32.totalorder 1, %s22
      %p256 = scmp.lt.s32.totalorder %s22, 5
      %p257 = pnand %p255, %p256
      %p258 = pneg %p257
      // Predicated region
      $region9: #{net_forward.1} parent=5 // pred_check
        _
      $region10: #{net_forward.1} parent=5 // pred_check_branch
        %260 = sbr.rel (%p257) target = $region12
      $region11: #{net_forward.1} parent=5 // pred_region
        %s261 = ssub.s32 %s22, 1
        // Predicated region
        $region13: #{net_forward.1} parent=11 // pred_check
          %p262 = pneg %p95
        $region14: #{net_forward.1} parent=11 // pred_check_branch
          %264 = sbr.rel (%p262) target = $region16
        $region15: #{net_forward.1} parent=11 // pred_region
          %s266 = ssub.s32 12288, 12288
          %267 = vsyncadd [#allocation5], %s266
          %s268 = sshll.u32 [#allocation6], 4
          %s269 = int_to_ptr.vmem [resolvable:$true] %s268
          %274 = dma.hbm_to_vmem [thread:$0]  %s2, 12288, %s269, [#allocation5], 256, 256, 16
        $region16: #{net_forward.1} parent=11 // pred_fallthru
          _
        // Predicated region
        $region17: #{net_forward.1} parent=11 // pred_check
          %p275 = pneg %p116
        $region18: #{net_forward.1} parent=11 // pred_check_branch
          %277 = sbr.rel (%p275) target = $region20
        $region19: #{net_forward.1} parent=11 // pred_region
          _
        $region20: #{net_forward.1} parent=11 // pred_fallthru
          _
        // Predicated region
        $region21: #{net_forward.1} parent=11 // pred_check
          %p278 = pneg %p137
        $region22: #{net_forward.1} parent=11 // pred_check_branch
          %280 = sbr.rel (%p278) target = $region24
        $region23: #{net_forward.1} parent=11 // pred_region
          _
        $region24: #{net_forward.1} parent=11 // pred_fallthru
          _
        // Predicated region
        $region25: #{net_forward.1} parent=11 // pred_check
          %p281 = pneg %p158
        $region26: #{net_forward.1} parent=11 // pred_check_branch
          %283 = sbr.rel (%p281) target = $region28
        $region27: #{net_forward.1} parent=11 // pred_region
          %s285 = ssub.s32 4096, 4096
          %286 = vsyncadd [#allocation8], %s285
          %s287 = sshll.u32 [#allocation7], 4
          %s288 = int_to_ptr.vmem [resolvable:$true] %s287
          %293 = dma.hbm_to_vmem [thread:$0]  %s5, 4096, %s288, [#allocation8], 128, 128, 8
        $region28: #{net_forward.1} parent=11 // pred_fallthru
          _
        // Predicated region
        $region29: #{net_forward.1} parent=11 // pred_check
          %p294 = pneg %p179
        $region30: #{net_forward.1} parent=11 // pred_check_branch
          %296 = sbr.rel (%p294) target = $region32
        $region31: #{net_forward.1} parent=11 // pred_region
          _
        $region32: #{net_forward.1} parent=11 // pred_fallthru
          _
        // Predicated region
        $region33: #{net_forward.1} parent=11 // pred_check
          %p297 = pneg %p200
        $region34: #{net_forward.1} parent=11 // pred_check_branch
          %299 = sbr.rel (%p297) target = $region36
        $region35: #{net_forward.1} parent=11 // pred_region
          %s301 = ssub.s32 2048, 2048
          %302 = vsyncadd [#allocation8], %s301
          %s303 = sshll.u32 [#allocation9], 4
          %s304 = int_to_ptr.vmem [resolvable:$true] %s303
          %309 = dma.hbm_to_vmem [thread:$0]  %s7, 2048, %s304, [#allocation8], 128, 128, 8
        $region36: #{net_forward.1} parent=11 // pred_fallthru
          _
        // Predicated region
        $region37: #{net_forward.1} parent=11 // pred_check
          %p310 = pneg %p221
        $region38: #{net_forward.1} parent=11 // pred_check_branch
          %312 = sbr.rel (%p310) target = $region40
        $region39: #{net_forward.1} parent=11 // pred_region
          _
        $region40: #{net_forward.1} parent=11 // pred_fallthru
          _
      $region12: #{net_forward.1} parent=5 // pred_fallthru
        _
      %p313 = scmp.lt.s32.totalorder %s22, 4
      // Predicated region
      $region41: #{net_forward.1} parent=5 // pred_check
        %p314 = pneg %p313
      $region42: #{net_forward.1} parent=5 // pred_check_branch
        %316 = sbr.rel (%p314) target = $region44
      $region43: #{net_forward.1} parent=5 // pred_region
        // Predicated region
        $region45: #{net_forward.1} parent=43 // pred_check
          %p317 = pneg %p42
        $region46: #{net_forward.1} parent=43 // pred_check_branch
          %319 = sbr.rel (%p317) target = $region48
        $region47: #{net_forward.1} parent=43 // pred_region
          %s320 = sand.u32 %s32, 1
          %s321 = scalar_lea.sflag [#allocation3], %s320
          %s322 = sand.u32 %s32, 1
          %s323 = smul.addr %s322, 32
          %s324 = scalar_lea.vmem [#allocation2], %s323
          %s326 = ssub.s32 512, 512
          %327 = vsyncadd %s321, %s326
          %s328 = smul.addr %s22, 8
          %s329 = smul.addr %s328, 64
          %s330 = scalar_lea.hbm %s0, %s329
          %s331 = sshll.u32 %s324, 4
          %s332 = int_to_ptr.vmem [resolvable:$true] %s331
          %337 = dma.hbm_to_vmem [thread:$0]  %s330, 512, %s332, %s321, 64, 64, 4
        $region48: #{net_forward.1} parent=43 // pred_fallthru
          _
        // Predicated region
        $region49: #{net_forward.1} parent=43 // pred_check
          %p338 = pneg %p68
        $region50: #{net_forward.1} parent=43 // pred_check_branch
          %340 = sbr.rel (%p338) target = $region52
        $region51: #{net_forward.1} parent=43 // pred_region
          %s341 = sand.u32 %s22, 1
          %s342 = scalar_lea.sflag [#allocation5], %s341
          %s343 = sand.u32 %s58, 1
          %s344 = smul.addr %s343, 384
          %s345 = scalar_lea.vmem [#allocation4], %s344
          %s347 = ssub.s32 6144, 6144
          %348 = vsyncadd %s342, %s347
          %s349 = smul.addr %s22, 96
          %s350 = smul.addr %s349, 64
          %s351 = scalar_lea.hbm %s1, %s350
          %s352 = sshll.u32 %s345, 4
          %s353 = int_to_ptr.vmem [resolvable:$true] %s352
          %358 = dma.hbm_to_vmem [thread:$0]  %s351, 6144, %s353, %s342, 768, 768, 48
        $region52: #{net_forward.1} parent=43 // pred_fallthru
          _
      $region44: #{net_forward.1} parent=5 // pred_fallthru
        _
      %p359 = scmp.le.s32.totalorder 1, %s22
      %p360 = scmp.lt.s32.totalorder %s22, 5
      %p361 = pnand %p359, %p360
      %p362 = pneg %p361
      // Predicated region
      $region53: #{net_forward.1} parent=5 // pred_check
        _
      $region54: #{net_forward.1} parent=5 // pred_check_branch
        %364 = sbr.rel (%p361) target = $region56
      $region55: #{net_forward.1} parent=5 // pred_region
        %s365 = ssub.s32 %s22, 1
        %s366 = sand.u32 %s35, 1
        %s367 = scalar_lea.sflag [#allocation3], %s366
        %s368 = sand.u32 %s35, 1
        %s369 = smul.addr %s368, 32
        %s370 = scalar_lea.vmem [#allocation2], %s369
        // Predicated region
        $region57: #{net_forward.1} parent=55 // pred_check
          %p371 = pneg %p48
        $region58: #{net_forward.1} parent=55 // pred_check_branch
          %373 = sbr.rel (%p371) target = $region60
        $region59: #{net_forward.1} parent=55 // pred_region
          %374 = dma.done %s367, 512
        $region60: #{net_forward.1} parent=55 // pred_fallthru
          _
        %s375 = sand.u32 %s27, 1
        %s376 = scalar_lea.sflag [#allocation5], %s375
        %s377 = sand.u32 %s61, 1
        %s378 = smul.addr %s377, 384
        %s379 = scalar_lea.vmem [#allocation4], %s378
        // Predicated region
        $region61: #{net_forward.1} parent=55 // pred_check
          %p380 = pneg %p74
        $region62: #{net_forward.1} parent=55 // pred_check_branch
          %382 = sbr.rel (%p380) target = $region64
        $region63: #{net_forward.1} parent=55 // pred_region
          %383 = dma.done %s376, 6144
        $region64: #{net_forward.1} parent=55 // pred_fallthru
          _
        // Predicated region
        $region65: #{net_forward.1} parent=55 // pred_check
          %p384 = pneg %p95
        $region66: #{net_forward.1} parent=55 // pred_check_branch
          %386 = sbr.rel (%p384) target = $region68
        $region67: #{net_forward.1} parent=55 // pred_region
          %387 = dma.done [#allocation5], 12288
        $region68: #{net_forward.1} parent=55 // pred_fallthru
          _
        // Predicated region
        $region69: #{net_forward.1} parent=55 // pred_check
          %p388 = pneg %p158
        $region70: #{net_forward.1} parent=55 // pred_check_branch
          %390 = sbr.rel (%p388) target = $region72
        $region71: #{net_forward.1} parent=55 // pred_region
          %391 = dma.done [#allocation8], 4096
        $region72: #{net_forward.1} parent=55 // pred_fallthru
          _
        // Predicated region
        $region73: #{net_forward.1} parent=55 // pred_check
          %p392 = pneg %p200
        $region74: #{net_forward.1} parent=55 // pred_check_branch
          %394 = sbr.rel (%p392) target = $region76
        $region75: #{net_forward.1} parent=55 // pred_region
          %395 = dma.done [#allocation8], 2048
        $region76: #{net_forward.1} parent=55 // pred_fallthru
          _
        %s396 = sand.u32 %s35, 1
        %s397 = scalar_lea.sflag [#allocation3], %s396
        %s398 = sand.u32 %s35, 1
        %s399 = smul.addr %s398, 32
        %s400 = scalar_lea.vmem [#allocation2], %s399
        %p401 = pneg %p48
        %p402 = pneg %p45
        %s403 = sand.u32 %s27, 1
        %s404 = scalar_lea.sflag [#allocation5], %s403
        %s405 = sand.u32 %s61, 1
        %s406 = smul.addr %s405, 384
        %s407 = scalar_lea.vmem [#allocation4], %s406
        %p408 = pneg %p74
        %p409 = pneg %p71
        %p410 = pneg %p95
        %p411 = pneg %p92
        %p412 = pneg %p116
        %p413 = pneg %p113
        %p414 = pneg %p137
        %p415 = pneg %p134
        %p416 = pneg %p158
        %p417 = pneg %p155
        %p418 = pneg %p179
        %p419 = pneg %p176
        %p420 = pneg %p200
        %p421 = pneg %p197
        %p422 = pneg %p221
        %p423 = pneg %p218
        %p424 = pneg %p247
        %p425 = pneg %p244
        %p426 = scmp.lt.s32.totalorder %s27, 3
        %s427 = scalar_select %p426, %s27, 3
        %s428 = smul.addr %s427, 8
        %s429 = smul.addr %s428, 4
        %s430 = scalar_lea.vmem %s9, %s429
        %p431 = scmp.lt.s32.totalorder %s27, 3
        %s432 = scalar_select %p431, %s27, 3
        %s433 = smul.addr %s432, 8
        %s434 = smul.addr %s433, 4
        %s435 = scalar_lea.vmem %s9, %s434
        %v436 = vld [vmem:[%s370] sm:$0xf]
        %v437 = vld [vmem:[%s370 + $0x4] sm:$0xf]
        %v438 = vld [vmem:[%s370 + $0x8] sm:$0xf]
        %v439 = vld [vmem:[%s370 + $0xc] sm:$0xf]
        %v440 = vld [vmem:[%s370 + $0x10] sm:$0xf]
        %v441 = vld [vmem:[%s370 + $0x14] sm:$0xf]
        %v442 = vld [vmem:[%s370 + $0x18] sm:$0xf]
        %v443 = vld [vmem:[%s370 + $0x1c] sm:$0xf]
        %v444 = vunpack.c.l.bf16 %v436
        %v445 = vunpack.c.l.bf16 %v437
        %v446 = vunpack.c.l.bf16 %v438
        %v447 = vunpack.c.l.bf16 %v439
        %v448 = vunpack.c.l.bf16 %v440
        %v449 = vunpack.c.l.bf16 %v441
        %v450 = vunpack.c.l.bf16 %v442
        %v451 = vunpack.c.l.bf16 %v443
        %v452 = vld [vmem:[#allocation6] sm:$0xff]
        %v453 = vld [vmem:[#allocation6 + $0x8] sm:$0xff]
        %v454 = vld [vmem:[#allocation6 + $0x10] sm:$0xff]
        %v455 = vld [vmem:[#allocation6 + $0x18] sm:$0xff]
        %v456 = vld [vmem:[#allocation6 + $0x20] sm:$0xff]
        %v457 = vld [vmem:[#allocation6 + $0x28] sm:$0xff]
        %v458 = vld [vmem:[#allocation6 + $0x30] sm:$0xff]
        %v459 = vld [vmem:[#allocation6 + $0x38] sm:$0xff]
        %v460 = vld [vmem:[#allocation6 + $0x40] sm:$0xff]
        %v461 = vld [vmem:[#allocation6 + $0x48] sm:$0xff]
        %v462 = vld [vmem:[#allocation6 + $0x50] sm:$0xff]
        %v463 = vld [vmem:[#allocation6 + $0x58] sm:$0xff]
        %v464 = vld [vmem:[#allocation6 + $0x60] sm:$0xff]
        %v465 = vld [vmem:[#allocation6 + $0x68] sm:$0xff]
        %v466 = vld [vmem:[#allocation6 + $0x70] sm:$0xff]
        %v467 = vld [vmem:[#allocation6 + $0x78] sm:$0xff]
        %v468 = vld [vmem:[#allocation6 + $0x80] sm:$0xff]
        %v469 = vld [vmem:[#allocation6 + $0x88] sm:$0xff]
        %v470 = vld [vmem:[#allocation6 + $0x90] sm:$0xff]
        %v471 = vld [vmem:[#allocation6 + $0x98] sm:$0xff]
        %v472 = vld [vmem:[#allocation6 + $0xa0] sm:$0xff]
        %v473 = vld [vmem:[#allocation6 + $0xa8] sm:$0xff]
        %v474 = vld [vmem:[#allocation6 + $0xb0] sm:$0xff]
        %v475 = vld [vmem:[#allocation6 + $0xb8] sm:$0xff]
        %v476 = vld [vmem:[#allocation6 + $0xc0] sm:$0xff]
        %v477 = vld [vmem:[#allocation6 + $0xc8] sm:$0xff]
        %v478 = vld [vmem:[#allocation6 + $0xd0] sm:$0xff]
        %v479 = vld [vmem:[#allocation6 + $0xd8] sm:$0xff]
        %v480 = vld [vmem:[#allocation6 + $0xe0] sm:$0xff]
        %v481 = vld [vmem:[#allocation6 + $0xe8] sm:$0xff]
        %v482 = vld [vmem:[#allocation6 + $0xf0] sm:$0xff]
        %v483 = vld [vmem:[#allocation6 + $0xf8] sm:$0xff]
        %v484 = vld [vmem:[#allocation6 + $0x100] sm:$0xff]
        %v485 = vld [vmem:[#allocation6 + $0x108] sm:$0xff]
        %v486 = vld [vmem:[#allocation6 + $0x110] sm:$0xff]
        %v487 = vld [vmem:[#allocation6 + $0x118] sm:$0xff]
        %v488 = vld [vmem:[#allocation6 + $0x120] sm:$0xff]
        %v489 = vld [vmem:[#allocation6 + $0x128] sm:$0xff]
        %v490 = vld [vmem:[#allocation6 + $0x130] sm:$0xff]
        %v491 = vld [vmem:[#allocation6 + $0x138] sm:$0xff]
        %v492 = vld [vmem:[#allocation6 + $0x140] sm:$0xff]
        %v493 = vld [vmem:[#allocation6 + $0x148] sm:$0xff]
        %v494 = vld [vmem:[#allocation6 + $0x150] sm:$0xff]
        %v495 = vld [vmem:[#allocation6 + $0x158] sm:$0xff]
        %v496 = vld [vmem:[#allocation6 + $0x160] sm:$0xff]
        %v497 = vld [vmem:[#allocation6 + $0x168] sm:$0xff]
        %v498 = vld [vmem:[#allocation6 + $0x170] sm:$0xff]
        %v499 = vld [vmem:[#allocation6 + $0x178] sm:$0xff]
        %v500 = vld [vmem:[#allocation6 + $0x180] sm:$0xff]
        %v501 = vld [vmem:[#allocation6 + $0x188] sm:$0xff]
        %v502 = vld [vmem:[#allocation6 + $0x190] sm:$0xff]
        %v503 = vld [vmem:[#allocation6 + $0x198] sm:$0xff]
        %v504 = vld [vmem:[#allocation6 + $0x1a0] sm:$0xff]
        %v505 = vld [vmem:[#allocation6 + $0x1a8] sm:$0xff]
        %v506 = vld [vmem:[#allocation6 + $0x1b0] sm:$0xff]
        %v507 = vld [vmem:[#allocation6 + $0x1b8] sm:$0xff]
        %v508 = vld [vmem:[#allocation6 + $0x1c0] sm:$0xff]
        %v509 = vld [vmem:[#allocation6 + $0x1c8] sm:$0xff]
        %v510 = vld [vmem:[#allocation6 + $0x1d0] sm:$0xff]
        %v511 = vld [vmem:[#allocation6 + $0x1d8] sm:$0xff]
        %v512 = vld [vmem:[#allocation6 + $0x1e0] sm:$0xff]
        %v513 = vld [vmem:[#allocation6 + $0x1e8] sm:$0xff]
        %v514 = vld [vmem:[#allocation6 + $0x1f0] sm:$0xff]
        %v515 = vld [vmem:[#allocation6 + $0x1f8] sm:$0xff]
        %v516 = vld [vmem:[#allocation6 + $0x200] sm:$0xff]
        %v517 = vld [vmem:[#allocation6 + $0x208] sm:$0xff]
        %v518 = vld [vmem:[#allocation6 + $0x210] sm:$0xff]
        %v519 = vld [vmem:[#allocation6 + $0x218] sm:$0xff]
        %v520 = vld [vmem:[#allocation6 + $0x220] sm:$0xff]
        %v521 = vld [vmem:[#allocation6 + $0x228] sm:$0xff]
        %v522 = vld [vmem:[#allocation6 + $0x230] sm:$0xff]
        %v523 = vld [vmem:[#allocation6 + $0x238] sm:$0xff]
        %v524 = vld [vmem:[#allocation6 + $0x240] sm:$0xff]
        %v525 = vld [vmem:[#allocation6 + $0x248] sm:$0xff]
        %v526 = vld [vmem:[#allocation6 + $0x250] sm:$0xff]
        %v527 = vld [vmem:[#allocation6 + $0x258] sm:$0xff]
        %v528 = vld [vmem:[#allocation6 + $0x260] sm:$0xff]
        %v529 = vld [vmem:[#allocation6 + $0x268] sm:$0xff]
        %v530 = vld [vmem:[#allocation6 + $0x270] sm:$0xff]
        %v531 = vld [vmem:[#allocation6 + $0x278] sm:$0xff]
        %v532 = vld [vmem:[#allocation6 + $0x280] sm:$0xff]
        %v533 = vld [vmem:[#allocation6 + $0x288] sm:$0xff]
        %v534 = vld [vmem:[#allocation6 + $0x290] sm:$0xff]
        %v535 = vld [vmem:[#allocation6 + $0x298] sm:$0xff]
        %v536 = vld [vmem:[#allocation6 + $0x2a0] sm:$0xff]
        %v537 = vld [vmem:[#allocation6 + $0x2a8] sm:$0xff]
        %v538 = vld [vmem:[#allocation6 + $0x2b0] sm:$0xff]
        %v539 = vld [vmem:[#allocation6 + $0x2b8] sm:$0xff]
        %v540 = vld [vmem:[#allocation6 + $0x2c0] sm:$0xff]
        %v541 = vld [vmem:[#allocation6 + $0x2c8] sm:$0xff]
        %v542 = vld [vmem:[#allocation6 + $0x2d0] sm:$0xff]
        %v543 = vld [vmem:[#allocation6 + $0x2d8] sm:$0xff]
        %v544 = vld [vmem:[#allocation6 + $0x2e0] sm:$0xff]
        %v545 = vld [vmem:[#allocation6 + $0x2e8] sm:$0xff]
        %v546 = vld [vmem:[#allocation6 + $0x2f0] sm:$0xff]
        %v547 = vld [vmem:[#allocation6 + $0x2f8] sm:$0xff]
        %v548 = vunpack.c.l.s8.bf16 %v452
        %v549 = vunpack.c.l.s8.bf16 %v453
        %v550 = vunpack.c.h.s8.bf16 %v452
        %v551 = vunpack.c.h.s8.bf16 %v453
        %v552 = vunpack.c.l.s8.bf16 %v454
        %v553 = vunpack.c.l.s8.bf16 %v455
        %v554 = vunpack.c.h.s8.bf16 %v454
        %v555 = vunpack.c.h.s8.bf16 %v455
        %v556 = vunpack.c.l.s8.bf16 %v456
        %v557 = vunpack.c.l.s8.bf16 %v457
        %v558 = vunpack.c.h.s8.bf16 %v456
        %v559 = vunpack.c.h.s8.bf16 %v457
        %v560 = vunpack.c.l.s8.bf16 %v458
        %v561 = vunpack.c.l.s8.bf16 %v459
        %v562 = vunpack.c.h.s8.bf16 %v458
        %v563 = vunpack.c.h.s8.bf16 %v459
        %v564 = vunpack.c.l.s8.bf16 %v460
        %v565 = vunpack.c.l.s8.bf16 %v461
        %v566 = vunpack.c.h.s8.bf16 %v460
        %v567 = vunpack.c.h.s8.bf16 %v461
        %v568 = vunpack.c.l.s8.bf16 %v462
        %v569 = vunpack.c.l.s8.bf16 %v463
        %v570 = vunpack.c.h.s8.bf16 %v462
        %v571 = vunpack.c.h.s8.bf16 %v463
        %v572 = vunpack.c.l.s8.bf16 %v464
        %v573 = vunpack.c.l.s8.bf16 %v465
        %v574 = vunpack.c.h.s8.bf16 %v464
        %v575 = vunpack.c.h.s8.bf16 %v465
        %v576 = vunpack.c.l.s8.bf16 %v466
        %v577 = vunpack.c.l.s8.bf16 %v467
        %v578 = vunpack.c.h.s8.bf16 %v466
        %v579 = vunpack.c.h.s8.bf16 %v467
        %v580 = vunpack.c.l.s8.bf16 %v468
        %v581 = vunpack.c.l.s8.bf16 %v469
        %v582 = vunpack.c.h.s8.bf16 %v468
        %v583 = vunpack.c.h.s8.bf16 %v469
        %v584 = vunpack.c.l.s8.bf16 %v470
        %v585 = vunpack.c.l.s8.bf16 %v471
        %v586 = vunpack.c.h.s8.bf16 %v470
        %v587 = vunpack.c.h.s8.bf16 %v471
        %v588 = vunpack.c.l.s8.bf16 %v472
        %v589 = vunpack.c.l.s8.bf16 %v473
        %v590 = vunpack.c.h.s8.bf16 %v472
        %v591 = vunpack.c.h.s8.bf16 %v473
        %v592 = vunpack.c.l.s8.bf16 %v474
        %v593 = vunpack.c.l.s8.bf16 %v475
        %v594 = vunpack.c.h.s8.bf16 %v474
        %v595 = vunpack.c.h.s8.bf16 %v475
        %v596 = vunpack.c.l.s8.bf16 %v476
        %v597 = vunpack.c.l.s8.bf16 %v477
        %v598 = vunpack.c.h.s8.bf16 %v476
        %v599 = vunpack.c.h.s8.bf16 %v477
        %v600 = vunpack.c.l.s8.bf16 %v478
        %v601 = vunpack.c.l.s8.bf16 %v479
        %v602 = vunpack.c.h.s8.bf16 %v478
        %v603 = vunpack.c.h.s8.bf16 %v479
        %v604 = vunpack.c.l.s8.bf16 %v480
        %v605 = vunpack.c.l.s8.bf16 %v481
        %v606 = vunpack.c.h.s8.bf16 %v480
        %v607 = vunpack.c.h.s8.bf16 %v481
        %v608 = vunpack.c.l.s8.bf16 %v482
        %v609 = vunpack.c.l.s8.bf16 %v483
        %v610 = vunpack.c.h.s8.bf16 %v482
        %v611 = vunpack.c.h.s8.bf16 %v483
        %v612 = vunpack.c.l.s8.bf16 %v484
        %v613 = vunpack.c.l.s8.bf16 %v485
        %v614 = vunpack.c.h.s8.bf16 %v484
        %v615 = vunpack.c.h.s8.bf16 %v485
        %v616 = vunpack.c.l.s8.bf16 %v486
        %v617 = vunpack.c.l.s8.bf16 %v487
        %v618 = vunpack.c.h.s8.bf16 %v486
        %v619 = vunpack.c.h.s8.bf16 %v487
        %v620 = vunpack.c.l.s8.bf16 %v488
        %v621 = vunpack.c.l.s8.bf16 %v489
        %v622 = vunpack.c.h.s8.bf16 %v488
        %v623 = vunpack.c.h.s8.bf16 %v489
        %v624 = vunpack.c.l.s8.bf16 %v490
        %v625 = vunpack.c.l.s8.bf16 %v491
        %v626 = vunpack.c.h.s8.bf16 %v490
        %v627 = vunpack.c.h.s8.bf16 %v491
        %v628 = vunpack.c.l.s8.bf16 %v492
        %v629 = vunpack.c.l.s8.bf16 %v493
        %v630 = vunpack.c.h.s8.bf16 %v492
        %v631 = vunpack.c.h.s8.bf16 %v493
        %v632 = vunpack.c.l.s8.bf16 %v494
        %v633 = vunpack.c.l.s8.bf16 %v495
        %v634 = vunpack.c.h.s8.bf16 %v494
        %v635 = vunpack.c.h.s8.bf16 %v495
        %v636 = vunpack.c.l.s8.bf16 %v496
        %v637 = vunpack.c.l.s8.bf16 %v497
        %v638 = vunpack.c.h.s8.bf16 %v496
        %v639 = vunpack.c.h.s8.bf16 %v497
        %v640 = vunpack.c.l.s8.bf16 %v498
        %v641 = vunpack.c.l.s8.bf16 %v499
        %v642 = vunpack.c.h.s8.bf16 %v498
        %v643 = vunpack.c.h.s8.bf16 %v499
        %v644 = vunpack.c.l.s8.bf16 %v500
        %v645 = vunpack.c.l.s8.bf16 %v501
        %v646 = vunpack.c.h.s8.bf16 %v500
        %v647 = vunpack.c.h.s8.bf16 %v501
        %v648 = vunpack.c.l.s8.bf16 %v502
        %v649 = vunpack.c.l.s8.bf16 %v503
        %v650 = vunpack.c.h.s8.bf16 %v502
        %v651 = vunpack.c.h.s8.bf16 %v503
        %v652 = vunpack.c.l.s8.bf16 %v504
        %v653 = vunpack.c.l.s8.bf16 %v505
        %v654 = vunpack.c.h.s8.bf16 %v504
        %v655 = vunpack.c.h.s8.bf16 %v505
        %v656 = vunpack.c.l.s8.bf16 %v506
        %v657 = vunpack.c.l.s8.bf16 %v507
        %v658 = vunpack.c.h.s8.bf16 %v506
        %v659 = vunpack.c.h.s8.bf16 %v507
        %v660 = vunpack.c.l.s8.bf16 %v508
        %v661 = vunpack.c.l.s8.bf16 %v509
        %v662 = vunpack.c.h.s8.bf16 %v508
        %v663 = vunpack.c.h.s8.bf16 %v509
        %v664 = vunpack.c.l.s8.bf16 %v510
        %v665 = vunpack.c.l.s8.bf16 %v511
        %v666 = vunpack.c.h.s8.bf16 %v510
        %v667 = vunpack.c.h.s8.bf16 %v511
        %v668 = vunpack.c.l.s8.bf16 %v512
        %v669 = vunpack.c.l.s8.bf16 %v513
        %v670 = vunpack.c.h.s8.bf16 %v512
        %v671 = vunpack.c.h.s8.bf16 %v513
        %v672 = vunpack.c.l.s8.bf16 %v514
        %v673 = vunpack.c.l.s8.bf16 %v515
        %v674 = vunpack.c.h.s8.bf16 %v514
        %v675 = vunpack.c.h.s8.bf16 %v515
        %v676 = vunpack.c.l.s8.bf16 %v516
        %v677 = vunpack.c.l.s8.bf16 %v517
        %v678 = vunpack.c.h.s8.bf16 %v516
        %v679 = vunpack.c.h.s8.bf16 %v517
        %v680 = vunpack.c.l.s8.bf16 %v518
        %v681 = vunpack.c.l.s8.bf16 %v519
        %v682 = vunpack.c.h.s8.bf16 %v518
        %v683 = vunpack.c.h.s8.bf16 %v519
        %v684 = vunpack.c.l.s8.bf16 %v520
        %v685 = vunpack.c.l.s8.bf16 %v521
        %v686 = vunpack.c.h.s8.bf16 %v520
        %v687 = vunpack.c.h.s8.bf16 %v521
        %v688 = vunpack.c.l.s8.bf16 %v522
        %v689 = vunpack.c.l.s8.bf16 %v523
        %v690 = vunpack.c.h.s8.bf16 %v522
        %v691 = vunpack.c.h.s8.bf16 %v523
        %v692 = vunpack.c.l.s8.bf16 %v524
        %v693 = vunpack.c.l.s8.bf16 %v525
        %v694 = vunpack.c.h.s8.bf16 %v524
        %v695 = vunpack.c.h.s8.bf16 %v525
        %v696 = vunpack.c.l.s8.bf16 %v526
        %v697 = vunpack.c.l.s8.bf16 %v527
        %v698 = vunpack.c.h.s8.bf16 %v526
        %v699 = vunpack.c.h.s8.bf16 %v527
        %v700 = vunpack.c.l.s8.bf16 %v528
        %v701 = vunpack.c.l.s8.bf16 %v529
        %v702 = vunpack.c.h.s8.bf16 %v528
        %v703 = vunpack.c.h.s8.bf16 %v529
        %v704 = vunpack.c.l.s8.bf16 %v530
        %v705 = vunpack.c.l.s8.bf16 %v531
        %v706 = vunpack.c.h.s8.bf16 %v530
        %v707 = vunpack.c.h.s8.bf16 %v531
        %v708 = vunpack.c.l.s8.bf16 %v532
        %v709 = vunpack.c.l.s8.bf16 %v533
        %v710 = vunpack.c.h.s8.bf16 %v532
        %v711 = vunpack.c.h.s8.bf16 %v533
        %v712 = vunpack.c.l.s8.bf16 %v534
        %v713 = vunpack.c.l.s8.bf16 %v535
        %v714 = vunpack.c.h.s8.bf16 %v534
        %v715 = vunpack.c.h.s8.bf16 %v535
        %v716 = vunpack.c.l.s8.bf16 %v536
        %v717 = vunpack.c.l.s8.bf16 %v537
        %v718 = vunpack.c.h.s8.bf16 %v536
        %v719 = vunpack.c.h.s8.bf16 %v537
        %v720 = vunpack.c.l.s8.bf16 %v538
        %v721 = vunpack.c.l.s8.bf16 %v539
        %v722 = vunpack.c.h.s8.bf16 %v538
        %v723 = vunpack.c.h.s8.bf16 %v539
        %v724 = vunpack.c.l.s8.bf16 %v540
        %v725 = vunpack.c.l.s8.bf16 %v541
        %v726 = vunpack.c.h.s8.bf16 %v540
        %v727 = vunpack.c.h.s8.bf16 %v541
        %v728 = vunpack.c.l.s8.bf16 %v542
        %v729 = vunpack.c.l.s8.bf16 %v543
        %v730 = vunpack.c.h.s8.bf16 %v542
        %v731 = vunpack.c.h.s8.bf16 %v543
        %v732 = vunpack.c.l.s8.bf16 %v544
        %v733 = vunpack.c.l.s8.bf16 %v545
        %v734 = vunpack.c.h.s8.bf16 %v544
        %v735 = vunpack.c.h.s8.bf16 %v545
        %v736 = vunpack.c.l.s8.bf16 %v546
        %v737 = vunpack.c.l.s8.bf16 %v547
        %v738 = vunpack.c.h.s8.bf16 %v546
        %v739 = vunpack.c.h.s8.bf16 %v547
        %v740 = vld [vmem:[%s379] sm:$0xff]
        %v741 = vld [vmem:[%s379 + $0x8] sm:$0xff]
        %v742 = vld [vmem:[%s379 + $0x10] sm:$0xff]
        %v743 = vld [vmem:[%s379 + $0x18] sm:$0xff]
        %v744 = vld [vmem:[%s379 + $0x20] sm:$0xff]
        %v745 = vld [vmem:[%s379 + $0x28] sm:$0xff]
        %v746 = vld [vmem:[%s379 + $0x30] sm:$0xff]
        %v747 = vld [vmem:[%s379 + $0x38] sm:$0xff]
        %v748 = vld [vmem:[%s379 + $0x40] sm:$0xff]
        %v749 = vld [vmem:[%s379 + $0x48] sm:$0xff]
        %v750 = vld [vmem:[%s379 + $0x50] sm:$0xff]
        %v751 = vld [vmem:[%s379 + $0x58] sm:$0xff]
        %v752 = vld [vmem:[%s379 + $0x60] sm:$0xff]
        %v753 = vld [vmem:[%s379 + $0x68] sm:$0xff]
        %v754 = vld [vmem:[%s379 + $0x70] sm:$0xff]
        %v755 = vld [vmem:[%s379 + $0x78] sm:$0xff]
        %v756 = vld [vmem:[%s379 + $0x80] sm:$0xff]
        %v757 = vld [vmem:[%s379 + $0x88] sm:$0xff]
        %v758 = vld [vmem:[%s379 + $0x90] sm:$0xff]
        %v759 = vld [vmem:[%s379 + $0x98] sm:$0xff]
        %v760 = vld [vmem:[%s379 + $0xa0] sm:$0xff]
        %v761 = vld [vmem:[%s379 + $0xa8] sm:$0xff]
        %v762 = vld [vmem:[%s379 + $0xb0] sm:$0xff]
        %v763 = vld [vmem:[%s379 + $0xb8] sm:$0xff]
        %v764 = vld [vmem:[%s379 + $0xc0] sm:$0xff]
        %v765 = vld [vmem:[%s379 + $0xc8] sm:$0xff]
        %v766 = vld [vmem:[%s379 + $0xd0] sm:$0xff]
        %v767 = vld [vmem:[%s379 + $0xd8] sm:$0xff]
        %v768 = vld [vmem:[%s379 + $0xe0] sm:$0xff]
        %v769 = vld [vmem:[%s379 + $0xe8] sm:$0xff]
        %v770 = vld [vmem:[%s379 + $0xf0] sm:$0xff]
        %v771 = vld [vmem:[%s379 + $0xf8] sm:$0xff]
        %v772 = vld [vmem:[%s379 + $0x100] sm:$0xff]
        %v773 = vld [vmem:[%s379 + $0x108] sm:$0xff]
        %v774 = vld [vmem:[%s379 + $0x110] sm:$0xff]
        %v775 = vld [vmem:[%s379 + $0x118] sm:$0xff]
        %v776 = vld [vmem:[%s379 + $0x120] sm:$0xff]
        %v777 = vld [vmem:[%s379 + $0x128] sm:$0xff]
        %v778 = vld [vmem:[%s379 + $0x130] sm:$0xff]
        %v779 = vld [vmem:[%s379 + $0x138] sm:$0xff]
        %v780 = vld [vmem:[%s379 + $0x140] sm:$0xff]
        %v781 = vld [vmem:[%s379 + $0x148] sm:$0xff]
        %v782 = vld [vmem:[%s379 + $0x150] sm:$0xff]
        %v783 = vld [vmem:[%s379 + $0x158] sm:$0xff]
        %v784 = vld [vmem:[%s379 + $0x160] sm:$0xff]
        %v785 = vld [vmem:[%s379 + $0x168] sm:$0xff]
        %v786 = vld [vmem:[%s379 + $0x170] sm:$0xff]
        %v787 = vld [vmem:[%s379 + $0x178] sm:$0xff]
        %v836 = vunpack.c.l.b16 %v740
        %v837 = vunpack.c.h.b16 %v740
        %v838 = vunpack.c.l.b16 %v741
        %v839 = vunpack.c.h.b16 %v741
        %v840 = vunpack.c.l.b16 %v742
        %v841 = vunpack.c.h.b16 %v742
        %v842 = vunpack.c.l.b16 %v743
        %v843 = vunpack.c.h.b16 %v743
        %v844 = vunpack.c.l.b16 %v744
        %v845 = vunpack.c.h.b16 %v744
        %v846 = vunpack.c.l.b16 %v745
        %v847 = vunpack.c.h.b16 %v745
        %v848 = vunpack.c.l.b16 %v746
        %v849 = vunpack.c.h.b16 %v746
        %v850 = vunpack.c.l.b16 %v747
        %v851 = vunpack.c.h.b16 %v747
        %v852 = vunpack.c.l.b16 %v748
        %v853 = vunpack.c.h.b16 %v748
        %v854 = vunpack.c.l.b16 %v749
        %v855 = vunpack.c.h.b16 %v749
        %v856 = vunpack.c.l.b16 %v750
        %v857 = vunpack.c.h.b16 %v750
        %v858 = vunpack.c.l.b16 %v751
        %v859 = vunpack.c.h.b16 %v751
        %v860 = vunpack.c.l.b16 %v752
        %v861 = vunpack.c.h.b16 %v752
        %v862 = vunpack.c.l.b16 %v753
        %v863 = vunpack.c.h.b16 %v753
        %v864 = vunpack.c.l.b16 %v754
        %v865 = vunpack.c.h.b16 %v754
        %v866 = vunpack.c.l.b16 %v755
        %v867 = vunpack.c.h.b16 %v755
        %v868 = vunpack.c.l.b16 %v756
        %v869 = vunpack.c.h.b16 %v756
        %v870 = vunpack.c.l.b16 %v757
        %v871 = vunpack.c.h.b16 %v757
        %v872 = vunpack.c.l.b16 %v758
        %v873 = vunpack.c.h.b16 %v758
        %v874 = vunpack.c.l.b16 %v759
        %v875 = vunpack.c.h.b16 %v759
        %v876 = vunpack.c.l.b16 %v760
        %v877 = vunpack.c.h.b16 %v760
        %v878 = vunpack.c.l.b16 %v761
        %v879 = vunpack.c.h.b16 %v761
        %v880 = vunpack.c.l.b16 %v762
        %v881 = vunpack.c.h.b16 %v762
        %v882 = vunpack.c.l.b16 %v763
        %v883 = vunpack.c.h.b16 %v763
        %v884 = vunpack.c.l.b16 %v764
        %v885 = vunpack.c.h.b16 %v764
        %v886 = vunpack.c.l.b16 %v765
        %v887 = vunpack.c.h.b16 %v765
        %v888 = vunpack.c.l.b16 %v766
        %v889 = vunpack.c.h.b16 %v766
        %v890 = vunpack.c.l.b16 %v767
        %v891 = vunpack.c.h.b16 %v767
        %v892 = vunpack.c.l.b16 %v768
        %v893 = vunpack.c.h.b16 %v768
        %v894 = vunpack.c.l.b16 %v769
        %v895 = vunpack.c.h.b16 %v769
        %v896 = vunpack.c.l.b16 %v770
        %v897 = vunpack.c.h.b16 %v770
        %v898 = vunpack.c.l.b16 %v771
        %v899 = vunpack.c.h.b16 %v771
        %v900 = vunpack.c.l.b16 %v772
        %v901 = vunpack.c.h.b16 %v772
        %v902 = vunpack.c.l.b16 %v773
        %v903 = vunpack.c.h.b16 %v773
        %v904 = vunpack.c.l.b16 %v774
        %v905 = vunpack.c.h.b16 %v774
        %v906 = vunpack.c.l.b16 %v775
        %v907 = vunpack.c.h.b16 %v775
        %v908 = vunpack.c.l.b16 %v776
        %v909 = vunpack.c.h.b16 %v776
        %v910 = vunpack.c.l.b16 %v777
        %v911 = vunpack.c.h.b16 %v777
        %v912 = vunpack.c.l.b16 %v778
        %v913 = vunpack.c.h.b16 %v778
        %v914 = vunpack.c.l.b16 %v779
        %v915 = vunpack.c.h.b16 %v779
        %v916 = vunpack.c.l.b16 %v780
        %v917 = vunpack.c.h.b16 %v780
        %v918 = vunpack.c.l.b16 %v781
        %v919 = vunpack.c.h.b16 %v781
        %v920 = vunpack.c.l.b16 %v782
        %v921 = vunpack.c.h.b16 %v782
        %v922 = vunpack.c.l.b16 %v783
        %v923 = vunpack.c.h.b16 %v783
        %v924 = vunpack.c.l.b16 %v784
        %v925 = vunpack.c.h.b16 %v784
        %v926 = vunpack.c.l.b16 %v785
        %v927 = vunpack.c.h.b16 %v785
        %v928 = vunpack.c.l.b16 %v786
        %v929 = vunpack.c.h.b16 %v786
        %v930 = vunpack.c.l.b16 %v787
        %v931 = vunpack.c.h.b16 %v787
        %v932 = vpack.c.b16 %v848, %v836
        %v933 = vpack.c.b16 %v849, %v837
        %v934 = vpack.c.b16 %v850, %v838
        %v935 = vpack.c.b16 %v851, %v839
        %v936 = vpack.c.b16 %v852, %v840
        %v937 = vpack.c.b16 %v853, %v841
        %v938 = vpack.c.b16 %v854, %v842
        %v939 = vpack.c.b16 %v855, %v843
        %v940 = vpack.c.b16 %v856, %v844
        %v941 = vpack.c.b16 %v857, %v845
        %v942 = vpack.c.b16 %v858, %v846
        %v943 = vpack.c.b16 %v859, %v847
        %v944 = vpack.c.b16 %v872, %v860
        %v945 = vpack.c.b16 %v873, %v861
        %v946 = vpack.c.b16 %v874, %v862
        %v947 = vpack.c.b16 %v875, %v863
        %v948 = vpack.c.b16 %v876, %v864
        %v949 = vpack.c.b16 %v877, %v865
        %v950 = vpack.c.b16 %v878, %v866
        %v951 = vpack.c.b16 %v879, %v867
        %v952 = vpack.c.b16 %v880, %v868
        %v953 = vpack.c.b16 %v881, %v869
        %v954 = vpack.c.b16 %v882, %v870
        %v955 = vpack.c.b16 %v883, %v871
        %v956 = vpack.c.b16 %v896, %v884
        %v957 = vpack.c.b16 %v897, %v885
        %v958 = vpack.c.b16 %v898, %v886
        %v959 = vpack.c.b16 %v899, %v887
        %v960 = vpack.c.b16 %v900, %v888
        %v961 = vpack.c.b16 %v901, %v889
        %v962 = vpack.c.b16 %v902, %v890
        %v963 = vpack.c.b16 %v903, %v891
        %v964 = vpack.c.b16 %v904, %v892
        %v965 = vpack.c.b16 %v905, %v893
        %v966 = vpack.c.b16 %v906, %v894
        %v967 = vpack.c.b16 %v907, %v895
        %v968 = vpack.c.b16 %v920, %v908
        %v969 = vpack.c.b16 %v921, %v909
        %v970 = vpack.c.b16 %v922, %v910
        %v971 = vpack.c.b16 %v923, %v911
        %v972 = vpack.c.b16 %v924, %v912
        %v973 = vpack.c.b16 %v925, %v913
        %v974 = vpack.c.b16 %v926, %v914
        %v975 = vpack.c.b16 %v927, %v915
        %v976 = vpack.c.b16 %v928, %v916
        %v977 = vpack.c.b16 %v929, %v917
        %v978 = vpack.c.b16 %v930, %v918
        %v979 = vpack.c.b16 %v931, %v919
        %1028 = vmatprep.subr.bf16.mxu0 %v549
        %1029 = vmatpush1.bf16.msra.mxu0 %v548
        %1030 = vmatprep.subr.bf16.mxu0 %v551
        %1031 = vmatpush1.bf16.msra.mxu0 %v550
        %1032 = vmatprep.subr.bf16.mxu0 %v553
        %1033 = vmatpush1.bf16.msra.mxu0 %v552
        %1034 = vmatprep.subr.bf16.mxu0 %v555
        %1035 = vmatpush1.bf16.msra.mxu0 %v554
        %1036 = vmatprep.subr.bf16.mxu0 %v557
        %1037 = vmatpush1.bf16.msra.mxu0 %v556
        %1038 = vmatprep.subr.bf16.mxu0 %v559
        %1039 = vmatpush1.bf16.msra.mxu0 %v558
        %1040 = vmatprep.subr.bf16.mxu0 %v561
        %1041 = vmatpush1.bf16.msra.mxu0 %v560
        %1042 = vmatprep.subr.bf16.mxu0 %v563
        %1043 = vmatpush1.bf16.msra.mxu0 %v562
        %1044 = vmatprep.subr.bf16.mxu0 %v565
        %1045 = vmatpush1.bf16.msra.mxu0 %v564
        %1046 = vmatprep.subr.bf16.mxu0 %v567
        %1047 = vmatpush1.bf16.msra.mxu0 %v566
        %1048 = vmatprep.subr.bf16.mxu0 %v569
        %1049 = vmatpush1.bf16.msra.mxu0 %v568
        %1050 = vmatprep.subr.bf16.mxu0 %v571
        %1051 = vmatpush1.bf16.msra.mxu0 %v570
        %1052 = vmatprep.subr.bf16.mxu0 %v573
        %1053 = vmatpush1.bf16.msra.mxu0 %v572
        %1054 = vmatprep.subr.bf16.mxu0 %v575
        %1055 = vmatpush1.bf16.msra.mxu0 %v574
        %1056 = vmatprep.subr.bf16.mxu0 %v577
        %1057 = vmatpush1.bf16.msra.mxu0 %v576
        %1058 = vmatprep.subr.bf16.mxu0 %v579
        %1059 = vmatpush1.bf16.msra.mxu0 %v578
        %1060 = vmatprep.mubr.bf16.mxu0 %v933
        %1061 = vmatmul.mubr.bf16.gmra.mrb[0].mxu0 %v932
        %v1062 = vpop.f32.mrb[0].mxu0
        %v1063 = vadd.f32 0.0, %v1062
        %v1064 = vpop.f32.mrb[0].mxu0
        %v1065 = vadd.f32 0.0, %v1064
        %v1066 = vpop.f32.mrb[0].mxu0
        %v1067 = vadd.f32 0.0, %v1066
        %v1068 = vpop.f32.mrb[0].mxu0
        %v1069 = vadd.f32 0.0, %v1068
        %1070 = vmatprep.mubr.bf16.mxu0 %v945
        %1071 = vmatmul.mubr.bf16.gmra.mrb[0].mxu0 %v944
        %v1072 = vpop.f32.mrb[0].mxu0
        %v1073 = vadd.f32 0.0, %v1072
        %v1074 = vpop.f32.mrb[0].mxu0
        %v1075 = vadd.f32 0.0, %v1074
        %v1076 = vpop.f32.mrb[0].mxu0
        %v1077 = vadd.f32 0.0, %v1076
        %v1078 = vpop.f32.mrb[0].mxu0
        %v1079 = vadd.f32 0.0, %v1078
        %1080 = vmatprep.mubr.bf16.mxu0 %v957
        %1081 = vmatmul.mubr.bf16.gmra.mrb[0].mxu0 %v956
        %v1082 = vpop.f32.mrb[0].mxu0
        %v1083 = vadd.f32 0.0, %v1082
        %v1084 = vpop.f32.mrb[0].mxu0
        %v1085 = vadd.f32 0.0, %v1084
        %v1086 = vpop.f32.mrb[0].mxu0
        %v1087 = vadd.f32 0.0, %v1086
        %v1088 = vpop.f32.mrb[0].mxu0
        %v1089 = vadd.f32 0.0, %v1088
        %1090 = vmatprep.mubr.bf16.mxu0 %v969
        %1091 = vmatmul.mubr.bf16.gmra.mrb[0].mxu0 %v968
        %v1092 = vpop.f32.mrb[0].mxu0
        %v1093 = vadd.f32 0.0, %v1092
        %v1094 = vpop.f32.mrb[0].mxu0
        %v1095 = vadd.f32 0.0, %v1094
        %v1096 = vpop.f32.mrb[0].mxu0
        %v1097 = vadd.f32 0.0, %v1096
        %v1098 = vpop.f32.mrb[0].mxu0
        %v1099 = vadd.f32 0.0, %v1098
        %1100 = vdwg.mxu0
        %1101 = vmatprep.subr.bf16.mxu0 %v581
        %1102 = vmatpush1.bf16.msra.mxu0 %v580
        %1103 = vmatprep.subr.bf16.mxu0 %v583
        %1104 = vmatpush1.bf16.msra.mxu0 %v582
        %1105 = vmatprep.subr.bf16.mxu0 %v585
        %1106 = vmatpush1.bf16.msra.mxu0 %v584
        %1107 = vmatprep.subr.bf16.mxu0 %v587
        %1108 = vmatpush1.bf16.msra.mxu0 %v586
        %1109 = vmatprep.subr.bf16.mxu0 %v589
        %1110 = vmatpush1.bf16.msra.mxu0 %v588
        %1111 = vmatprep.subr.bf16.mxu0 %v591
        %1112 = vmatpush1.bf16.msra.mxu0 %v590
        %1113 = vmatprep.subr.bf16.mxu0 %v593
        %1114 = vmatpush1.bf16.msra.mxu0 %v592
        %1115 = vmatprep.subr.bf16.mxu0 %v595
        %1116 = vmatpush1.bf16.msra.mxu0 %v594
        %1117 = vmatprep.subr.bf16.mxu0 %v597
        %1118 = vmatpush1.bf16.msra.mxu0 %v596
        %1119 = vmatprep.subr.bf16.mxu0 %v599
        %1120 = vmatpush1.bf16.msra.mxu0 %v598
        %1121 = vmatprep.subr.bf16.mxu0 %v601
        %1122 = vmatpush1.bf16.msra.mxu0 %v600
        %1123 = vmatprep.subr.bf16.mxu0 %v603
        %1124 = vmatpush1.bf16.msra.mxu0 %v602
        %1125 = vmatprep.subr.bf16.mxu0 %v605
        %1126 = vmatpush1.bf16.msra.mxu0 %v604
        %1127 = vmatprep.subr.bf16.mxu0 %v607
        %1128 = vmatpush1.bf16.msra.mxu0 %v606
        %1129 = vmatprep.subr.bf16.mxu0 %v609
        %1130 = vmatpush1.bf16.msra.mxu0 %v608
        %1131 = vmatprep.subr.bf16.mxu0 %v611
        %1132 = vmatpush1.bf16.msra.mxu0 %v610
        %1133 = vmatprep.mubr.bf16.mxu0 %v935
        %1134 = vmatmul.mubr.bf16.gmra.mrb[0].mxu0 %v934
        %v1135 = vpop.f32.mrb[0].mxu0
        %v1136 = vadd.f32 %v1063, %v1135
        %v1137 = vpop.f32.mrb[0].mxu0
        %v1138 = vadd.f32 %v1065, %v1137
        %v1139 = vpop.f32.mrb[0].mxu0
        %v1140 = vadd.f32 %v1067, %v1139
        %v1141 = vpop.f32.mrb[0].mxu0
        %v1142 = vadd.f32 %v1069, %v1141
        %1143 = vmatprep.mubr.bf16.mxu0 %v947
        %1144 = vmatmul.mubr.bf16.gmra.mrb[0].mxu0 %v946
        %v1145 = vpop.f32.mrb[0].mxu0
        %v1146 = vadd.f32 %v1073, %v1145
        %v1147 = vpop.f32.mrb[0].mxu0
        %v1148 = vadd.f32 %v1075, %v1147
        %v1149 = vpop.f32.mrb[0].mxu0
        %v1150 = vadd.f32 %v1077, %v1149
        %v1151 = vpop.f32.mrb[0].mxu0
        %v1152 = vadd.f32 %v1079, %v1151
        %1153 = vmatprep.mubr.bf16.mxu0 %v959
        %1154 = vmatmul.mubr.bf16.gmra.mrb[0].mxu0 %v958
        %v1155 = vpop.f32.mrb[0].mxu0
        %v1156 = vadd.f32 %v1083, %v1155
        %v1157 = vpop.f32.mrb[0].mxu0
        %v1158 = vadd.f32 %v1085, %v1157
        %v1159 = vpop.f32.mrb[0].mxu0
        %v1160 = vadd.f32 %v1087, %v1159
        %v1161 = vpop.f32.mrb[0].mxu0
        %v1162 = vadd.f32 %v1089, %v1161
        %1163 = vmatprep.mubr.bf16.mxu0 %v971
        %1164 = vmatmul.mubr.bf16.gmra.mrb[0].mxu0 %v970
        %v1165 = vpop.f32.mrb[0].mxu0
        %v1166 = vadd.f32 %v1093, %v1165
        %v1167 = vpop.f32.mrb[0].mxu0
        %v1168 = vadd.f32 %v1095, %v1167
        %v1169 = vpop.f32.mrb[0].mxu0
        %v1170 = vadd.f32 %v1097, %v1169
        %v1171 = vpop.f32.mrb[0].mxu0
        %v1172 = vadd.f32 %v1099, %v1171
        %1173 = vdwg.mxu0
        %1174 = vmatprep.subr.bf16.mxu0 %v613
        %1175 = vmatpush1.bf16.msra.mxu0 %v612
        %1176 = vmatprep.subr.bf16.mxu0 %v615
        %1177 = vmatpush1.bf16.msra.mxu0 %v614
        %1178 = vmatprep.subr.bf16.mxu0 %v617
        %1179 = vmatpush1.bf16.msra.mxu0 %v616
        %1180 = vmatprep.subr.bf16.mxu0 %v619
        %1181 = vmatpush1.bf16.msra.mxu0 %v618
        %1182 = vmatprep.subr.bf16.mxu0 %v621
        %1183 = vmatpush1.bf16.msra.mxu0 %v620
        %1184 = vmatprep.subr.bf16.mxu0 %v623
        %1185 = vmatpush1.bf16.msra.mxu0 %v622
        %1186 = vmatprep.subr.bf16.mxu0 %v625
        %1187 = vmatpush1.bf16.msra.mxu0 %v624
        %1188 = vmatprep.subr.bf16.mxu0 %v627
        %1189 = vmatpush1.bf16.msra.mxu0 %v626
        %1190 = vmatprep.subr.bf16.mxu0 %v629
        %1191 = vmatpush1.bf16.msra.mxu0 %v628
        %1192 = vmatprep.subr.bf16.mxu0 %v631
        %1193 = vmatpush1.bf16.msra.mxu0 %v630
        %1194 = vmatprep.subr.bf16.mxu0 %v633
        %1195 = vmatpush1.bf16.msra.mxu0 %v632
        %1196 = vmatprep.subr.bf16.mxu0 %v635
        %1197 = vmatpush1.bf16.msra.mxu0 %v634
        %1198 = vmatprep.subr.bf16.mxu0 %v637
        %1199 = vmatpush1.bf16.msra.mxu0 %v636
        %1200 = vmatprep.subr.bf16.mxu0 %v639
        %1201 = vmatpush1.bf16.msra.mxu0 %v638
        %1202 = vmatprep.subr.bf16.mxu0 %v641
        %1203 = vmatpush1.bf16.msra.mxu0 %v640
        %1204 = vmatprep.subr.bf16.mxu0 %v643
        %1205 = vmatpush1.bf16.msra.mxu0 %v642
        %1206 = vmatprep.mubr.bf16.mxu0 %v937
        %1207 = vmatmul.mubr.bf16.gmra.mrb[0].mxu0 %v936
        %v1208 = vpop.f32.mrb[0].mxu0
        %v1209 = vadd.f32 %v1136, %v1208
        %v1210 = vpop.f32.mrb[0].mxu0
        %v1211 = vadd.f32 %v1138, %v1210
        %v1212 = vpop.f32.mrb[0].mxu0
        %v1213 = vadd.f32 %v1140, %v1212
        %v1214 = vpop.f32.mrb[0].mxu0
        %v1215 = vadd.f32 %v1142, %v1214
        %1216 = vmatprep.mubr.bf16.mxu0 %v949
        %1217 = vmatmul.mubr.bf16.gmra.mrb[0].mxu0 %v948
        %v1218 = vpop.f32.mrb[0].mxu0
        %v1219 = vadd.f32 %v1146, %v1218
        %v1220 = vpop.f32.mrb[0].mxu0
        %v1221 = vadd.f32 %v1148, %v1220
        %v1222 = vpop.f32.mrb[0].mxu0
        %v1223 = vadd.f32 %v1150, %v1222
        %v1224 = vpop.f32.mrb[0].mxu0
        %v1225 = vadd.f32 %v1152, %v1224
        %1226 = vmatprep.mubr.bf16.mxu0 %v961
        %1227 = vmatmul.mubr.bf16.gmra.mrb[0].mxu0 %v960
        %v1228 = vpop.f32.mrb[0].mxu0
        %v1229 = vadd.f32 %v1156, %v1228
        %v1230 = vpop.f32.mrb[0].mxu0
        %v1231 = vadd.f32 %v1158, %v1230
        %v1232 = vpop.f32.mrb[0].mxu0
        %v1233 = vadd.f32 %v1160, %v1232
        %v1234 = vpop.f32.mrb[0].mxu0
        %v1235 = vadd.f32 %v1162, %v1234
        %1236 = vmatprep.mubr.bf16.mxu0 %v973
        %1237 = vmatmul.mubr.bf16.gmra.mrb[0].mxu0 %v972
        %v1238 = vpop.f32.mrb[0].mxu0
        %v1239 = vadd.f32 %v1166, %v1238
        %v1240 = vpop.f32.mrb[0].mxu0
        %v1241 = vadd.f32 %v1168, %v1240
        %v1242 = vpop.f32.mrb[0].mxu0
        %v1243 = vadd.f32 %v1170, %v1242
        %v1244 = vpop.f32.mrb[0].mxu0
        %v1245 = vadd.f32 %v1172, %v1244
        %1246 = vdwg.mxu0
        %1247 = vmatprep.subr.bf16.mxu0 %v645
        %1248 = vmatpush1.bf16.msra.mxu0 %v644
        %1249 = vmatprep.subr.bf16.mxu0 %v647
        %1250 = vmatpush1.bf16.msra.mxu0 %v646
        %1251 = vmatprep.subr.bf16.mxu0 %v649
        %1252 = vmatpush1.bf16.msra.mxu0 %v648
        %1253 = vmatprep.subr.bf16.mxu0 %v651
        %1254 = vmatpush1.bf16.msra.mxu0 %v650
        %1255 = vmatprep.subr.bf16.mxu0 %v653
        %1256 = vmatpush1.bf16.msra.mxu0 %v652
        %1257 = vmatprep.subr.bf16.mxu0 %v655
        %1258 = vmatpush1.bf16.msra.mxu0 %v654
        %1259 = vmatprep.subr.bf16.mxu0 %v657
        %1260 = vmatpush1.bf16.msra.mxu0 %v656
        %1261 = vmatprep.subr.bf16.mxu0 %v659
        %1262 = vmatpush1.bf16.msra.mxu0 %v658
        %1263 = vmatprep.subr.bf16.mxu0 %v661
        %1264 = vmatpush1.bf16.msra.mxu0 %v660
        %1265 = vmatprep.subr.bf16.mxu0 %v663
        %1266 = vmatpush1.bf16.msra.mxu0 %v662
        %1267 = vmatprep.subr.bf16.mxu0 %v665
        %1268 = vmatpush1.bf16.msra.mxu0 %v664
        %1269 = vmatprep.subr.bf16.mxu0 %v667
        %1270 = vmatpush1.bf16.msra.mxu0 %v666
        %1271 = vmatprep.subr.bf16.mxu0 %v669
        %1272 = vmatpush1.bf16.msra.mxu0 %v668
        %1273 = vmatprep.subr.bf16.mxu0 %v671
        %1274 = vmatpush1.bf16.msra.mxu0 %v670
        %1275 = vmatprep.subr.bf16.mxu0 %v673
        %1276 = vmatpush1.bf16.msra.mxu0 %v672
        %1277 = vmatprep.subr.bf16.mxu0 %v675
        %1278 = vmatpush1.bf16.msra.mxu0 %v674
        %1279 = vmatprep.mubr.bf16.mxu0 %v939
        %1280 = vmatmul.mubr.bf16.gmra.mrb[0].mxu0 %v938
        %v1281 = vpop.f32.mrb[0].mxu0
        %v1282 = vadd.f32 %v1209, %v1281
        %v1283 = vpop.f32.mrb[0].mxu0
        %v1284 = vadd.f32 %v1211, %v1283
        %v1285 = vpop.f32.mrb[0].mxu0
        %v1286 = vadd.f32 %v1213, %v1285
        %v1287 = vpop.f32.mrb[0].mxu0
        %v1288 = vadd.f32 %v1215, %v1287
        %1289 = vmatprep.mubr.bf16.mxu0 %v951
        %1290 = vmatmul.mubr.bf16.gmra.mrb[0].mxu0 %v950
        %v1291 = vpop.f32.mrb[0].mxu0
        %v1292 = vadd.f32 %v1219, %v1291
        %v1293 = vpop.f32.mrb[0].mxu0
        %v1294 = vadd.f32 %v1221, %v1293
        %v1295 = vpop.f32.mrb[0].mxu0
        %v1296 = vadd.f32 %v1223, %v1295
        %v1297 = vpop.f32.mrb[0].mxu0
        %v1298 = vadd.f32 %v1225, %v1297
        %1299 = vmatprep.mubr.bf16.mxu0 %v963
        %1300 = vmatmul.mubr.bf16.gmra.mrb[0].mxu0 %v962
        %v1301 = vpop.f32.mrb[0].mxu0
        %v1302 = vadd.f32 %v1229, %v1301
        %v1303 = vpop.f32.mrb[0].mxu0
        %v1304 = vadd.f32 %v1231, %v1303
        %v1305 = vpop.f32.mrb[0].mxu0
        %v1306 = vadd.f32 %v1233, %v1305
        %v1307 = vpop.f32.mrb[0].mxu0
        %v1308 = vadd.f32 %v1235, %v1307
        %1309 = vmatprep.mubr.bf16.mxu0 %v975
        %1310 = vmatmul.mubr.bf16.gmra.mrb[0].mxu0 %v974
        %v1311 = vpop.f32.mrb[0].mxu0
        %v1312 = vadd.f32 %v1239, %v1311
        %v1313 = vpop.f32.mrb[0].mxu0
        %v1314 = vadd.f32 %v1241, %v1313
        %v1315 = vpop.f32.mrb[0].mxu0
        %v1316 = vadd.f32 %v1243, %v1315
        %v1317 = vpop.f32.mrb[0].mxu0
        %v1318 = vadd.f32 %v1245, %v1317
        %1319 = vdwg.mxu0
        %1320 = vmatprep.subr.bf16.mxu0 %v677
        %1321 = vmatpush1.bf16.msra.mxu0 %v676
        %1322 = vmatprep.subr.bf16.mxu0 %v679
        %1323 = vmatpush1.bf16.msra.mxu0 %v678
        %1324 = vmatprep.subr.bf16.mxu0 %v681
        %1325 = vmatpush1.bf16.msra.mxu0 %v680
        %1326 = vmatprep.subr.bf16.mxu0 %v683
        %1327 = vmatpush1.bf16.msra.mxu0 %v682
        %1328 = vmatprep.subr.bf16.mxu0 %v685
        %1329 = vmatpush1.bf16.msra.mxu0 %v684
        %1330 = vmatprep.subr.bf16.mxu0 %v687
        %1331 = vmatpush1.bf16.msra.mxu0 %v686
        %1332 = vmatprep.subr.bf16.mxu0 %v689
        %1333 = vmatpush1.bf16.msra.mxu0 %v688
        %1334 = vmatprep.subr.bf16.mxu0 %v691
        %1335 = vmatpush1.bf16.msra.mxu0 %v690
        %1336 = vmatprep.subr.bf16.mxu0 %v693
        %1337 = vmatpush1.bf16.msra.mxu0 %v692
        %1338 = vmatprep.subr.bf16.mxu0 %v695
        %1339 = vmatpush1.bf16.msra.mxu0 %v694
        %1340 = vmatprep.subr.bf16.mxu0 %v697
        %1341 = vmatpush1.bf16.msra.mxu0 %v696
        %1342 = vmatprep.subr.bf16.mxu0 %v699
        %1343 = vmatpush1.bf16.msra.mxu0 %v698
        %1344 = vmatprep.subr.bf16.mxu0 %v701
        %1345 = vmatpush1.bf16.msra.mxu0 %v700
        %1346 = vmatprep.subr.bf16.mxu0 %v703
        %1347 = vmatpush1.bf16.msra.mxu0 %v702
        %1348 = vmatprep.subr.bf16.mxu0 %v705
        %1349 = vmatpush1.bf16.msra.mxu0 %v704
        %1350 = vmatprep.subr.bf16.mxu0 %v707
        %1351 = vmatpush1.bf16.msra.mxu0 %v706
        %1352 = vmatprep.mubr.bf16.mxu0 %v941
        %1353 = vmatmul.mubr.bf16.gmra.mrb[0].mxu0 %v940
        %v1354 = vpop.f32.mrb[0].mxu0
        %v1355 = vadd.f32 %v1282, %v1354
        %v1356 = vpop.f32.mrb[0].mxu0
        %v1357 = vadd.f32 %v1284, %v1356
        %v1358 = vpop.f32.mrb[0].mxu0
        %v1359 = vadd.f32 %v1286, %v1358
        %v1360 = vpop.f32.mrb[0].mxu0
        %v1361 = vadd.f32 %v1288, %v1360
        %1362 = vmatprep.mubr.bf16.mxu0 %v953
        %1363 = vmatmul.mubr.bf16.gmra.mrb[0].mxu0 %v952
        %v1364 = vpop.f32.mrb[0].mxu0
        %v1365 = vadd.f32 %v1292, %v1364
        %v1366 = vpop.f32.mrb[0].mxu0
        %v1367 = vadd.f32 %v1294, %v1366
        %v1368 = vpop.f32.mrb[0].mxu0
        %v1369 = vadd.f32 %v1296, %v1368
        %v1370 = vpop.f32.mrb[0].mxu0
        %v1371 = vadd.f32 %v1298, %v1370
        %1372 = vmatprep.mubr.bf16.mxu0 %v965
        %1373 = vmatmul.mubr.bf16.gmra.mrb[0].mxu0 %v964
        %v1374 = vpop.f32.mrb[0].mxu0
        %v1375 = vadd.f32 %v1302, %v1374
        %v1376 = vpop.f32.mrb[0].mxu0
        %v1377 = vadd.f32 %v1304, %v1376
        %v1378 = vpop.f32.mrb[0].mxu0
        %v1379 = vadd.f32 %v1306, %v1378
        %v1380 = vpop.f32.mrb[0].mxu0
        %v1381 = vadd.f32 %v1308, %v1380
        %1382 = vmatprep.mubr.bf16.mxu0 %v977
        %1383 = vmatmul.mubr.bf16.gmra.mrb[0].mxu0 %v976
        %v1384 = vpop.f32.mrb[0].mxu0
        %v1385 = vadd.f32 %v1312, %v1384
        %v1386 = vpop.f32.mrb[0].mxu0
        %v1387 = vadd.f32 %v1314, %v1386
        %v1388 = vpop.f32.mrb[0].mxu0
        %v1389 = vadd.f32 %v1316, %v1388
        %v1390 = vpop.f32.mrb[0].mxu0
        %v1391 = vadd.f32 %v1318, %v1390
        %1392 = vdwg.mxu0
        %1393 = vmatprep.subr.bf16.mxu0 %v709
        %1394 = vmatpush1.bf16.msra.mxu0 %v708
        %1395 = vmatprep.subr.bf16.mxu0 %v711
        %1396 = vmatpush1.bf16.msra.mxu0 %v710
        %1397 = vmatprep.subr.bf16.mxu0 %v713
        %1398 = vmatpush1.bf16.msra.mxu0 %v712
        %1399 = vmatprep.subr.bf16.mxu0 %v715
        %1400 = vmatpush1.bf16.msra.mxu0 %v714
        %1401 = vmatprep.subr.bf16.mxu0 %v717
        %1402 = vmatpush1.bf16.msra.mxu0 %v716
        %1403 = vmatprep.subr.bf16.mxu0 %v719
        %1404 = vmatpush1.bf16.msra.mxu0 %v718
        %1405 = vmatprep.subr.bf16.mxu0 %v721
        %1406 = vmatpush1.bf16.msra.mxu0 %v720
        %1407 = vmatprep.subr.bf16.mxu0 %v723
        %1408 = vmatpush1.bf16.msra.mxu0 %v722
        %1409 = vmatprep.subr.bf16.mxu0 %v725
        %1410 = vmatpush1.bf16.msra.mxu0 %v724
        %1411 = vmatprep.subr.bf16.mxu0 %v727
        %1412 = vmatpush1.bf16.msra.mxu0 %v726
        %1413 = vmatprep.subr.bf16.mxu0 %v729
        %1414 = vmatpush1.bf16.msra.mxu0 %v728
        %1415 = vmatprep.subr.bf16.mxu0 %v731
        %1416 = vmatpush1.bf16.msra.mxu0 %v730
        %1417 = vmatprep.subr.bf16.mxu0 %v733
        %1418 = vmatpush1.bf16.msra.mxu0 %v732
        %1419 = vmatprep.subr.bf16.mxu0 %v735
        %1420 = vmatpush1.bf16.msra.mxu0 %v734
        %1421 = vmatprep.subr.bf16.mxu0 %v737
        %1422 = vmatpush1.bf16.msra.mxu0 %v736
        %1423 = vmatprep.subr.bf16.mxu0 %v739
        %1424 = vmatpush1.bf16.msra.mxu0 %v738
        %1425 = vmatprep.mubr.bf16.mxu0 %v943
        %1426 = vmatmul.mubr.bf16.gmra.mrb[0].mxu0 %v942
        %v1427 = vpop.f32.mrb[0].mxu0
        %v1428 = vadd.f32 %v1355, %v1427
        %v1429 = vpop.f32.mrb[0].mxu0
        %v1430 = vadd.f32 %v1357, %v1429
        %v1431 = vpop.f32.mrb[0].mxu0
        %v1432 = vadd.f32 %v1359, %v1431
        %v1433 = vpop.f32.mrb[0].mxu0
        %v1434 = vadd.f32 %v1361, %v1433
        %1435 = vmatprep.mubr.bf16.mxu0 %v955
        %1436 = vmatmul.mubr.bf16.gmra.mrb[0].mxu0 %v954
        %v1437 = vpop.f32.mrb[0].mxu0
        %v1438 = vadd.f32 %v1365, %v1437
        %v1439 = vpop.f32.mrb[0].mxu0
        %v1440 = vadd.f32 %v1367, %v1439
        %v1441 = vpop.f32.mrb[0].mxu0
        %v1442 = vadd.f32 %v1369, %v1441
        %v1443 = vpop.f32.mrb[0].mxu0
        %v1444 = vadd.f32 %v1371, %v1443
        %1445 = vmatprep.mubr.bf16.mxu0 %v967
        %1446 = vmatmul.mubr.bf16.gmra.mrb[0].mxu0 %v966
        %v1447 = vpop.f32.mrb[0].mxu0
        %v1448 = vadd.f32 %v1375, %v1447
        %v1449 = vpop.f32.mrb[0].mxu0
        %v1450 = vadd.f32 %v1377, %v1449
        %v1451 = vpop.f32.mrb[0].mxu0
        %v1452 = vadd.f32 %v1379, %v1451
        %v1453 = vpop.f32.mrb[0].mxu0
        %v1454 = vadd.f32 %v1381, %v1453
        %1455 = vmatprep.mubr.bf16.mxu0 %v979
        %1456 = vmatmul.mubr.bf16.gmra.mrb[0].mxu0 %v978
        %v1457 = vpop.f32.mrb[0].mxu0
        %v1458 = vadd.f32 %v1385, %v1457
        %v1459 = vpop.f32.mrb[0].mxu0
        %v1460 = vadd.f32 %v1387, %v1459
        %v1461 = vpop.f32.mrb[0].mxu0
        %v1462 = vadd.f32 %v1389, %v1461
        %v1463 = vpop.f32.mrb[0].mxu0
        %v1464 = vadd.f32 %v1391, %v1463
        %1465 = vdwg.mxu0
        %v1466 = vld [vmem:[%s3] sm:$0x3]
        %v1468 = vlaneseq
        %v1469 = vshrl.u32 %v1468, 7
        %v1470 = vsub.s32 0, %v1469
        %v1471 = vrot.slane %v1466, %v1470
        %v1472 = vlaneseq
        %v1473 = vshrl.u32 %v1472, 7
        %v1474 = vsub.s32 1, %v1473
        %v1475 = vrot.slane %v1466, %v1474
        %v1478 = vmul.f32 %v1428, %v1471
        %v1479 = vmul.f32 %v1430, %v1475
        %v1480 = vmul.f32 %v1432, %v1471
        %v1481 = vmul.f32 %v1434, %v1475
        %v1482 = vmul.f32 %v1438, %v1471
        %v1483 = vmul.f32 %v1440, %v1475
        %v1484 = vmul.f32 %v1442, %v1471
        %v1485 = vmul.f32 %v1444, %v1475
        %v1486 = vmul.f32 %v1448, %v1471
        %v1487 = vmul.f32 %v1450, %v1475
        %v1488 = vmul.f32 %v1452, %v1471
        %v1489 = vmul.f32 %v1454, %v1475
        %v1490 = vmul.f32 %v1458, %v1471
        %v1491 = vmul.f32 %v1460, %v1475
        %v1492 = vmul.f32 %v1462, %v1471
        %v1493 = vmul.f32 %v1464, %v1475
        %v1494 = vld [vmem:[%s4] sm:$0x3]
        %v1496 = vlaneseq
        %v1497 = vshrl.u32 %v1496, 7
        %v1498 = vsub.s32 0, %v1497
        %v1499 = vrot.slane %v1494, %v1498
        %v1500 = vlaneseq
        %v1501 = vshrl.u32 %v1500, 7
        %v1502 = vsub.s32 1, %v1501
        %v1503 = vrot.slane %v1494, %v1502
        %vm1506 = vcmask 523264
        %v1508 = vsel %vm1506, %v444, 0
        %v1511 = vsel %vm1506, %v445, 0
        %v1514 = vsel %vm1506, %v446, 0
        %v1517 = vsel %vm1506, %v447, 0
        %v1520 = vsel %vm1506, %v448, 0
        %v1523 = vsel %vm1506, %v449, 0
        %v1526 = vsel %vm1506, %v450, 0
        %v1529 = vsel %vm1506, %v451, 0
        %1531 = vmatprep.subr.mxu0 %v1479
        %1532 = vmatpush1.msra.mxu0 %v1478
        %1533 = vmatprep.subr.mxu0 %v1481
        %1534 = vmatpush1.msra.mxu0 %v1480
        %1535 = vmatprep.subr.mxu0 %v1483
        %1536 = vmatpush1.msra.mxu0 %v1482
        %1537 = vmatprep.subr.mxu0 %v1485
        %1538 = vmatpush1.msra.mxu0 %v1484
        %1539 = vmatprep.subr.mxu0 %v1487
        %1540 = vmatpush1.msra.mxu0 %v1486
        %1541 = vmatprep.subr.mxu0 %v1489
        %1542 = vmatpush1.msra.mxu0 %v1488
        %1543 = vmatprep.subr.mxu0 %v1491
        %1544 = vmatpush1.msra.mxu0 %v1490
        %1545 = vmatprep.subr.mxu0 %v1493
        %1546 = vmatpush1.msra.mxu0 %v1492
        %1547 = vmatprep.subr.mxu0 0.0
        %1548 = vmatpush1.msra.mxu0 0.0
        %1549 = vmatprep.subr.mxu0 0.0
        %1550 = vmatpush1.msra.mxu0 0.0
        %1551 = vmatprep.subr.mxu0 0.0
        %1552 = vmatpush1.msra.mxu0 0.0
        %1553 = vmatprep.subr.mxu0 0.0
        %1554 = vmatpush1.msra.mxu0 0.0
        %1555 = vmatprep.subr.mxu0 0.0
        %1556 = vmatpush1.msra.mxu0 0.0
        %1557 = vmatprep.subr.mxu0 0.0
        %1558 = vmatpush1.msra.mxu0 0.0
        %1559 = vmatprep.subr.mxu0 0.0
        %1560 = vmatpush1.msra.mxu0 0.0
        %1561 = vmatprep.subr.mxu0 0.0
        %1562 = vmatpush1.msra.mxu0 0.0
        %1563 = vmatprep.subr.mxu0 0.0
        %1564 = vmatpush1.msra.mxu0 0.0
        %1565 = vmatprep.subr.mxu0 0.0
        %1566 = vmatpush1.msra.mxu0 0.0
        %1567 = vmatprep.subr.mxu0 0.0
        %1568 = vmatpush1.msra.mxu0 0.0
        %1569 = vmatprep.subr.mxu0 0.0
        %1570 = vmatpush1.msra.mxu0 0.0
        %1571 = vmatprep.subr.mxu0 0.0
        %1572 = vmatpush1.msra.mxu0 0.0
        %1573 = vmatprep.subr.mxu0 0.0
        %1574 = vmatpush1.msra.mxu0 0.0
        %1575 = vmatprep.subr.mxu0 0.0
        %1576 = vmatpush1.msra.mxu0 0.0
        %1577 = vmatprep.subr.mxu0 0.0
        %1578 = vmatpush1.msra.mxu0 0.0
        %1579 = vmatprep.subr.mxu0 0.0
        %1580 = vmatpush1.msra.mxu0 0.0
        %1581 = vmatprep.subr.mxu0 0.0
        %1582 = vmatpush1.msra.mxu0 0.0
        %1583 = vmatprep.subr.mxu0 0.0
        %1584 = vmatpush1.msra.mxu0 0.0
        %1585 = vmatprep.subr.mxu0 0.0
        %1586 = vmatpush1.msra.mxu0 0.0
        %1587 = vmatprep.subr.mxu0 0.0
        %1588 = vmatpush1.msra.mxu0 0.0
        %1589 = vmatprep.subr.mxu0 0.0
        %1590 = vmatpush1.msra.mxu0 0.0
        %1591 = vmatprep.subr.mxu0 0.0
        %1592 = vmatpush1.msra.mxu0 0.0
        %1593 = vmatprep.subr.mxu0 0.0
        %1594 = vmatpush1.msra.mxu0 0.0
        %1595 = vmatprep.mubr.f32.mxu0 0.0
        %1596 = vmatmul.mubr.f32.gmra.mrb[0].mxu0 %v1508
        %v1597 = vpop.f32.mrb[0].mxu0
        %v1598 = vadd.f32 %v1499, %v1597
        %v1599 = vpop.f32.mrb[0].mxu0
        %v1600 = vadd.f32 %v1503, %v1599
        %1601 = vmatprep.mubr.f32.mxu0 0.0
        %1602 = vmatmul.mubr.f32.gmra.mrb[0].mxu0 %v1511
        %v1603 = vpop.f32.mrb[0].mxu0
        %v1604 = vadd.f32 %v1499, %v1603
        %v1605 = vpop.f32.mrb[0].mxu0
        %v1606 = vadd.f32 %v1503, %v1605
        %1607 = vmatprep.mubr.f32.mxu0 0.0
        %1608 = vmatmul.mubr.f32.gmra.mrb[0].mxu0 %v1514
        %v1609 = vpop.f32.mrb[0].mxu0
        %v1610 = vadd.f32 %v1499, %v1609
        %v1611 = vpop.f32.mrb[0].mxu0
        %v1612 = vadd.f32 %v1503, %v1611
        %1613 = vmatprep.mubr.f32.mxu0 0.0
        %1614 = vmatmul.mubr.f32.gmra.mrb[0].mxu0 %v1517
        %v1615 = vpop.f32.mrb[0].mxu0
        %v1616 = vadd.f32 %v1499, %v1615
        %v1617 = vpop.f32.mrb[0].mxu0
        %v1618 = vadd.f32 %v1503, %v1617
        %1619 = vmatprep.mubr.f32.mxu0 0.0
        %1620 = vmatmul.mubr.f32.gmra.mrb[0].mxu0 %v1520
        %v1621 = vpop.f32.mrb[0].mxu0
        %v1622 = vadd.f32 %v1499, %v1621
        %v1623 = vpop.f32.mrb[0].mxu0
        %v1624 = vadd.f32 %v1503, %v1623
        %1625 = vmatprep.mubr.f32.mxu0 0.0
        %1626 = vmatmul.mubr.f32.gmra.mrb[0].mxu0 %v1523
        %v1627 = vpop.f32.mrb[0].mxu0
        %v1628 = vadd.f32 %v1499, %v1627
        %v1629 = vpop.f32.mrb[0].mxu0
        %v1630 = vadd.f32 %v1503, %v1629
        %1631 = vmatprep.mubr.f32.mxu0 0.0
        %1632 = vmatmul.mubr.f32.gmra.mrb[0].mxu0 %v1526
        %v1633 = vpop.f32.mrb[0].mxu0
        %v1634 = vadd.f32 %v1499, %v1633
        %v1635 = vpop.f32.mrb[0].mxu0
        %v1636 = vadd.f32 %v1503, %v1635
        %1637 = vmatprep.mubr.f32.mxu0 0.0
        %1638 = vmatmul.mubr.f32.gmra.mrb[0].mxu0 %v1529
        %v1639 = vpop.f32.mrb[0].mxu0
        %v1640 = vadd.f32 %v1499, %v1639
        %v1641 = vpop.f32.mrb[0].mxu0
        %v1642 = vadd.f32 %v1503, %v1641
        %1643 = vdwg.mxu0
        %v1644 = vmax.f32 %v1598, 0.0
        %v1645 = vmax.f32 %v1600, 0.0
        %v1646 = vmax.f32 %v1604, 0.0
        %v1647 = vmax.f32 %v1606, 0.0
        %v1648 = vmax.f32 %v1610, 0.0
        %v1649 = vmax.f32 %v1612, 0.0
        %v1650 = vmax.f32 %v1616, 0.0
        %v1651 = vmax.f32 %v1618, 0.0
        %v1652 = vmax.f32 %v1622, 0.0
        %v1653 = vmax.f32 %v1624, 0.0
        %v1654 = vmax.f32 %v1628, 0.0
        %v1655 = vmax.f32 %v1630, 0.0
        %v1656 = vmax.f32 %v1634, 0.0
        %v1657 = vmax.f32 %v1636, 0.0
        %v1658 = vmax.f32 %v1640, 0.0
        %v1659 = vmax.f32 %v1642, 0.0
        %v1660 = vld [vmem:[#allocation7] sm:$0xff]
        %v1661 = vld [vmem:[#allocation7 + $0x8] sm:$0xff]
        %v1662 = vld [vmem:[#allocation7 + $0x10] sm:$0xff]
        %v1663 = vld [vmem:[#allocation7 + $0x18] sm:$0xff]
        %v1664 = vld [vmem:[#allocation7 + $0x20] sm:$0xff]
        %v1665 = vld [vmem:[#allocation7 + $0x28] sm:$0xff]
        %v1666 = vld [vmem:[#allocation7 + $0x30] sm:$0xff]
        %v1667 = vld [vmem:[#allocation7 + $0x38] sm:$0xff]
        %v1668 = vld [vmem:[#allocation7 + $0x40] sm:$0xff]
        %v1669 = vld [vmem:[#allocation7 + $0x48] sm:$0xff]
        %v1670 = vld [vmem:[#allocation7 + $0x50] sm:$0xff]
        %v1671 = vld [vmem:[#allocation7 + $0x58] sm:$0xff]
        %v1672 = vld [vmem:[#allocation7 + $0x60] sm:$0xff]
        %v1673 = vld [vmem:[#allocation7 + $0x68] sm:$0xff]
        %v1674 = vld [vmem:[#allocation7 + $0x70] sm:$0xff]
        %v1675 = vld [vmem:[#allocation7 + $0x78] sm:$0xff]
        %v1676 = vld [vmem:[#allocation7 + $0x80] sm:$0xff]
        %v1677 = vld [vmem:[#allocation7 + $0x88] sm:$0xff]
        %v1678 = vld [vmem:[#allocation7 + $0x90] sm:$0xff]
        %v1679 = vld [vmem:[#allocation7 + $0x98] sm:$0xff]
        %v1680 = vld [vmem:[#allocation7 + $0xa0] sm:$0xff]
        %v1681 = vld [vmem:[#allocation7 + $0xa8] sm:$0xff]
        %v1682 = vld [vmem:[#allocation7 + $0xb0] sm:$0xff]
        %v1683 = vld [vmem:[#allocation7 + $0xb8] sm:$0xff]
        %v1684 = vld [vmem:[#allocation7 + $0xc0] sm:$0xff]
        %v1685 = vld [vmem:[#allocation7 + $0xc8] sm:$0xff]
        %v1686 = vld [vmem:[#allocation7 + $0xd0] sm:$0xff]
        %v1687 = vld [vmem:[#allocation7 + $0xd8] sm:$0xff]
        %v1688 = vld [vmem:[#allocation7 + $0xe0] sm:$0xff]
        %v1689 = vld [vmem:[#allocation7 + $0xe8] sm:$0xff]
        %v1690 = vld [vmem:[#allocation7 + $0xf0] sm:$0xff]
        %v1691 = vld [vmem:[#allocation7 + $0xf8] sm:$0xff]
        %1692 = vmatprep.subr.mxu0 0.0
        %1693 = vmatpush1.msra.mxu0 %v1660
        %1694 = vmatprep.subr.mxu0 0.0
        %1695 = vmatpush1.msra.mxu0 %v1661
        %1696 = vmatprep.subr.mxu0 0.0
        %1697 = vmatpush1.msra.mxu0 %v1662
        %1698 = vmatprep.subr.mxu0 0.0
        %1699 = vmatpush1.msra.mxu0 %v1663
        %1700 = vmatprep.subr.mxu0 0.0
        %1701 = vmatpush1.msra.mxu0 %v1664
        %1702 = vmatprep.subr.mxu0 0.0
        %1703 = vmatpush1.msra.mxu0 %v1665
        %1704 = vmatprep.subr.mxu0 0.0
        %1705 = vmatpush1.msra.mxu0 %v1666
        %1706 = vmatprep.subr.mxu0 0.0
        %1707 = vmatpush1.msra.mxu0 %v1667
        %1708 = vmatprep.subr.mxu0 0.0
        %1709 = vmatpush1.msra.mxu0 %v1668
        %1710 = vmatprep.subr.mxu0 0.0
        %1711 = vmatpush1.msra.mxu0 %v1669
        %1712 = vmatprep.subr.mxu0 0.0
        %1713 = vmatpush1.msra.mxu0 %v1670
        %1714 = vmatprep.subr.mxu0 0.0
        %1715 = vmatpush1.msra.mxu0 %v1671
        %1716 = vmatprep.subr.mxu0 0.0
        %1717 = vmatpush1.msra.mxu0 %v1672
        %1718 = vmatprep.subr.mxu0 0.0
        %1719 = vmatpush1.msra.mxu0 %v1673
        %1720 = vmatprep.subr.mxu0 0.0
        %1721 = vmatpush1.msra.mxu0 %v1674
        %1722 = vmatprep.subr.mxu0 0.0
        %1723 = vmatpush1.msra.mxu0 %v1675
        %1724 = vmatprep.subr.mxu0 0.0
        %1725 = vmatpush1.msra.mxu0 %v1676
        %1726 = vmatprep.subr.mxu0 0.0
        %1727 = vmatpush1.msra.mxu0 %v1677
        %1728 = vmatprep.subr.mxu0 0.0
        %1729 = vmatpush1.msra.mxu0 %v1678
        %1730 = vmatprep.subr.mxu0 0.0
        %1731 = vmatpush1.msra.mxu0 %v1679
        %1732 = vmatprep.subr.mxu0 0.0
        %1733 = vmatpush1.msra.mxu0 %v1680
        %1734 = vmatprep.subr.mxu0 0.0
        %1735 = vmatpush1.msra.mxu0 %v1681
        %1736 = vmatprep.subr.mxu0 0.0
        %1737 = vmatpush1.msra.mxu0 %v1682
        %1738 = vmatprep.subr.mxu0 0.0
        %1739 = vmatpush1.msra.mxu0 %v1683
        %1740 = vmatprep.subr.mxu0 0.0
        %1741 = vmatpush1.msra.mxu0 %v1684
        %1742 = vmatprep.subr.mxu0 0.0
        %1743 = vmatpush1.msra.mxu0 %v1685
        %1744 = vmatprep.subr.mxu0 0.0
        %1745 = vmatpush1.msra.mxu0 %v1686
        %1746 = vmatprep.subr.mxu0 0.0
        %1747 = vmatpush1.msra.mxu0 %v1687
        %1748 = vmatprep.subr.mxu0 0.0
        %1749 = vmatpush1.msra.mxu0 %v1688
        %1750 = vmatprep.subr.mxu0 0.0
        %1751 = vmatpush1.msra.mxu0 %v1689
        %1752 = vmatprep.subr.mxu0 0.0
        %1753 = vmatpush1.msra.mxu0 %v1690
        %1754 = vmatprep.subr.mxu0 0.0
        %1755 = vmatpush1.msra.mxu0 %v1691
        %1756 = vmatprep.mubr.f32.mxu0 %v1645
        %1757 = vmatmul.mubr.f32.gmra.mrb[0].mxu0 %v1644
        %v1758 = vpop.f32.mrb[0].mxu0
        %v1759 = vadd.f32 0.0, %v1758
        %v1760 = vpop.f32.mrb[0].mxu0
        %1761 = vmatprep.mubr.f32.mxu0 %v1647
        %1762 = vmatmul.mubr.f32.gmra.mrb[0].mxu0 %v1646
        %v1763 = vpop.f32.mrb[0].mxu0
        %v1764 = vadd.f32 0.0, %v1763
        %v1765 = vpop.f32.mrb[0].mxu0
        %1766 = vmatprep.mubr.f32.mxu0 %v1649
        %1767 = vmatmul.mubr.f32.gmra.mrb[0].mxu0 %v1648
        %v1768 = vpop.f32.mrb[0].mxu0
        %v1769 = vadd.f32 0.0, %v1768
        %v1770 = vpop.f32.mrb[0].mxu0
        %1771 = vmatprep.mubr.f32.mxu0 %v1651
        %1772 = vmatmul.mubr.f32.gmra.mrb[0].mxu0 %v1650
        %v1773 = vpop.f32.mrb[0].mxu0
        %v1774 = vadd.f32 0.0, %v1773
        %v1775 = vpop.f32.mrb[0].mxu0
        %1776 = vmatprep.mubr.f32.mxu0 %v1653
        %1777 = vmatmul.mubr.f32.gmra.mrb[0].mxu0 %v1652
        %v1778 = vpop.f32.mrb[0].mxu0
        %v1779 = vadd.f32 0.0, %v1778
        %v1780 = vpop.f32.mrb[0].mxu0
        %1781 = vmatprep.mubr.f32.mxu0 %v1655
        %1782 = vmatmul.mubr.f32.gmra.mrb[0].mxu0 %v1654
        %v1783 = vpop.f32.mrb[0].mxu0
        %v1784 = vadd.f32 0.0, %v1783
        %v1785 = vpop.f32.mrb[0].mxu0
        %1786 = vmatprep.mubr.f32.mxu0 %v1657
        %1787 = vmatmul.mubr.f32.gmra.mrb[0].mxu0 %v1656
        %v1788 = vpop.f32.mrb[0].mxu0
        %v1789 = vadd.f32 0.0, %v1788
        %v1790 = vpop.f32.mrb[0].mxu0
        %1791 = vmatprep.mubr.f32.mxu0 %v1659
        %1792 = vmatmul.mubr.f32.gmra.mrb[0].mxu0 %v1658
        %v1793 = vpop.f32.mrb[0].mxu0
        %v1794 = vadd.f32 0.0, %v1793
        %v1795 = vpop.f32.mrb[0].mxu0
        %1796 = vdwg.mxu0
        %v1797 = vld [vmem:[%s6] sm:$0x1]
        %v1799 = vlaneseq
        %v1800 = vshrl.u32 %v1799, 7
        %v1801 = vsub.s32 0, %v1800
        %v1802 = vrot.slane %v1797, %v1801
        %1804 = vmatprep.subr.mxu0 0.0
        %1805 = vmatpush1.msra.mxu0 %v1759
        %1806 = vmatprep.subr.mxu0 0.0
        %1807 = vmatpush1.msra.mxu0 %v1764
        %1808 = vmatprep.subr.mxu0 0.0
        %1809 = vmatpush1.msra.mxu0 %v1769
        %1810 = vmatprep.subr.mxu0 0.0
        %1811 = vmatpush1.msra.mxu0 %v1774
        %1812 = vmatprep.subr.mxu0 0.0
        %1813 = vmatpush1.msra.mxu0 %v1779
        %1814 = vmatprep.subr.mxu0 0.0
        %1815 = vmatpush1.msra.mxu0 %v1784
        %1816 = vmatprep.subr.mxu0 0.0
        %1817 = vmatpush1.msra.mxu0 %v1789
        %1818 = vmatprep.subr.mxu0 0.0
        %1819 = vmatpush1.msra.mxu0 %v1794
        %1820 = vmatprep.subr.mxu0 0.0
        %1821 = vmatpush1.msra.mxu0 0.0
        %1822 = vmatprep.subr.mxu0 0.0
        %1823 = vmatpush1.msra.mxu0 0.0
        %1824 = vmatprep.subr.mxu0 0.0
        %1825 = vmatpush1.msra.mxu0 0.0
        %1826 = vmatprep.subr.mxu0 0.0
        %1827 = vmatpush1.msra.mxu0 0.0
        %1828 = vmatprep.subr.mxu0 0.0
        %1829 = vmatpush1.msra.mxu0 0.0
        %1830 = vmatprep.subr.mxu0 0.0
        %1831 = vmatpush1.msra.mxu0 0.0
        %1832 = vmatprep.subr.mxu0 0.0
        %1833 = vmatpush1.msra.mxu0 0.0
        %1834 = vmatprep.subr.mxu0 0.0
        %1835 = vmatpush1.msra.mxu0 0.0
        %1836 = vmatprep.subr.mxu0 0.0
        %1837 = vmatpush1.msra.mxu0 0.0
        %1838 = vmatprep.subr.mxu0 0.0
        %1839 = vmatpush1.msra.mxu0 0.0
        %1840 = vmatprep.subr.mxu0 0.0
        %1841 = vmatpush1.msra.mxu0 0.0
        %1842 = vmatprep.subr.mxu0 0.0
        %1843 = vmatpush1.msra.mxu0 0.0
        %1844 = vmatprep.subr.mxu0 0.0
        %1845 = vmatpush1.msra.mxu0 0.0
        %1846 = vmatprep.subr.mxu0 0.0
        %1847 = vmatpush1.msra.mxu0 0.0
        %1848 = vmatprep.subr.mxu0 0.0
        %1849 = vmatpush1.msra.mxu0 0.0
        %1850 = vmatprep.subr.mxu0 0.0
        %1851 = vmatpush1.msra.mxu0 0.0
        %1852 = vmatprep.subr.mxu0 0.0
        %1853 = vmatpush1.msra.mxu0 0.0
        %1854 = vmatprep.subr.mxu0 0.0
        %1855 = vmatpush1.msra.mxu0 0.0
        %1856 = vmatprep.subr.mxu0 0.0
        %1857 = vmatpush1.msra.mxu0 0.0
        %1858 = vmatprep.subr.mxu0 0.0
        %1859 = vmatpush1.msra.mxu0 0.0
        %1860 = vmatprep.subr.mxu0 0.0
        %1861 = vmatpush1.msra.mxu0 0.0
        %1862 = vmatprep.subr.mxu0 0.0
        %1863 = vmatpush1.msra.mxu0 0.0
        %1864 = vmatprep.subr.mxu0 0.0
        %1865 = vmatpush1.msra.mxu0 0.0
        %1866 = vmatprep.subr.mxu0 0.0
        %1867 = vmatpush1.msra.mxu0 0.0
        %1868 = vmatprep.mubr.f32.mxu0 0.0
        %1869 = vmatmul.mubr.f32.gmra.mrb[0].mxu0 %v1508
        %v1870 = vpop.f32.mrb[0].mxu0
        %v1871 = vadd.f32 %v1802, %v1870
        %v1872 = vpop.f32.mrb[0].mxu0
        %1873 = vmatprep.mubr.f32.mxu0 0.0
        %1874 = vmatmul.mubr.f32.gmra.mrb[0].mxu0 %v1511
        %v1875 = vpop.f32.mrb[0].mxu0
        %v1876 = vadd.f32 %v1802, %v1875
        %v1877 = vpop.f32.mrb[0].mxu0
        %1878 = vmatprep.mubr.f32.mxu0 0.0
        %1879 = vmatmul.mubr.f32.gmra.mrb[0].mxu0 %v1514
        %v1880 = vpop.f32.mrb[0].mxu0
        %v1881 = vadd.f32 %v1802, %v1880
        %v1882 = vpop.f32.mrb[0].mxu0
        %1883 = vmatprep.mubr.f32.mxu0 0.0
        %1884 = vmatmul.mubr.f32.gmra.mrb[0].mxu0 %v1517
        %v1885 = vpop.f32.mrb[0].mxu0
        %v1886 = vadd.f32 %v1802, %v1885
        %v1887 = vpop.f32.mrb[0].mxu0
        %1888 = vmatprep.mubr.f32.mxu0 0.0
        %1889 = vmatmul.mubr.f32.gmra.mrb[0].mxu0 %v1520
        %v1890 = vpop.f32.mrb[0].mxu0
        %v1891 = vadd.f32 %v1802, %v1890
        %v1892 = vpop.f32.mrb[0].mxu0
        %1893 = vmatprep.mubr.f32.mxu0 0.0
        %1894 = vmatmul.mubr.f32.gmra.mrb[0].mxu0 %v1523
        %v1895 = vpop.f32.mrb[0].mxu0
        %v1896 = vadd.f32 %v1802, %v1895
        %v1897 = vpop.f32.mrb[0].mxu0
        %1898 = vmatprep.mubr.f32.mxu0 0.0
        %1899 = vmatmul.mubr.f32.gmra.mrb[0].mxu0 %v1526
        %v1900 = vpop.f32.mrb[0].mxu0
        %v1901 = vadd.f32 %v1802, %v1900
        %v1902 = vpop.f32.mrb[0].mxu0
        %1903 = vmatprep.mubr.f32.mxu0 0.0
        %1904 = vmatmul.mubr.f32.gmra.mrb[0].mxu0 %v1529
        %v1905 = vpop.f32.mrb[0].mxu0
        %v1906 = vadd.f32 %v1802, %v1905
        %v1907 = vpop.f32.mrb[0].mxu0
        %1908 = vdwg.mxu0
        %v1909 = vmax.f32 %v1871, 0.0
        %v1910 = vmax.f32 %v1876, 0.0
        %v1911 = vmax.f32 %v1881, 0.0
        %v1912 = vmax.f32 %v1886, 0.0
        %v1913 = vmax.f32 %v1891, 0.0
        %v1914 = vmax.f32 %v1896, 0.0
        %v1915 = vmax.f32 %v1901, 0.0
        %v1916 = vmax.f32 %v1906, 0.0
        %v1917 = vld [vmem:[#allocation9] sm:$0xff]
        %v1918 = vld [vmem:[#allocation9 + $0x8] sm:$0xff]
        %v1919 = vld [vmem:[#allocation9 + $0x10] sm:$0xff]
        %v1920 = vld [vmem:[#allocation9 + $0x18] sm:$0xff]
        %v1921 = vld [vmem:[#allocation9 + $0x20] sm:$0xff]
        %v1922 = vld [vmem:[#allocation9 + $0x28] sm:$0xff]
        %v1923 = vld [vmem:[#allocation9 + $0x30] sm:$0xff]
        %v1924 = vld [vmem:[#allocation9 + $0x38] sm:$0xff]
        %v1925 = vld [vmem:[#allocation9 + $0x40] sm:$0xff]
        %v1926 = vld [vmem:[#allocation9 + $0x48] sm:$0xff]
        %v1927 = vld [vmem:[#allocation9 + $0x50] sm:$0xff]
        %v1928 = vld [vmem:[#allocation9 + $0x58] sm:$0xff]
        %v1929 = vld [vmem:[#allocation9 + $0x60] sm:$0xff]
        %v1930 = vld [vmem:[#allocation9 + $0x68] sm:$0xff]
        %v1931 = vld [vmem:[#allocation9 + $0x70] sm:$0xff]
        %v1932 = vld [vmem:[#allocation9 + $0x78] sm:$0xff]
        %1933 = vmatprep.subr.mxu0 0.0
        %1934 = vmatpush1.msra.mxu0 %v1917
        %1935 = vmatprep.subr.mxu0 0.0
        %1936 = vmatpush1.msra.mxu0 %v1918
        %1937 = vmatprep.subr.mxu0 0.0
        %1938 = vmatpush1.msra.mxu0 %v1919
        %1939 = vmatprep.subr.mxu0 0.0
        %1940 = vmatpush1.msra.mxu0 %v1920
        %1941 = vmatprep.subr.mxu0 0.0
        %1942 = vmatpush1.msra.mxu0 %v1921
        %1943 = vmatprep.subr.mxu0 0.0
        %1944 = vmatpush1.msra.mxu0 %v1922
        %1945 = vmatprep.subr.mxu0 0.0
        %1946 = vmatpush1.msra.mxu0 %v1923
        %1947 = vmatprep.subr.mxu0 0.0
        %1948 = vmatpush1.msra.mxu0 %v1924
        %1949 = vmatprep.subr.mxu0 0.0
        %1950 = vmatpush1.msra.mxu0 %v1925
        %1951 = vmatprep.subr.mxu0 0.0
        %1952 = vmatpush1.msra.mxu0 %v1926
        %1953 = vmatprep.subr.mxu0 0.0
        %1954 = vmatpush1.msra.mxu0 %v1927
        %1955 = vmatprep.subr.mxu0 0.0
        %1956 = vmatpush1.msra.mxu0 %v1928
        %1957 = vmatprep.subr.mxu0 0.0
        %1958 = vmatpush1.msra.mxu0 %v1929
        %1959 = vmatprep.subr.mxu0 0.0
        %1960 = vmatpush1.msra.mxu0 %v1930
        %1961 = vmatprep.subr.mxu0 0.0
        %1962 = vmatpush1.msra.mxu0 %v1931
        %1963 = vmatprep.subr.mxu0 0.0
        %1964 = vmatpush1.msra.mxu0 %v1932
        %1965 = vmatprep.subr.mxu0 0.0
        %1966 = vmatpush1.msra.mxu0 0.0
        %1967 = vmatprep.subr.mxu0 0.0
        %1968 = vmatpush1.msra.mxu0 0.0
        %1969 = vmatprep.subr.mxu0 0.0
        %1970 = vmatpush1.msra.mxu0 0.0
        %1971 = vmatprep.subr.mxu0 0.0
        %1972 = vmatpush1.msra.mxu0 0.0
        %1973 = vmatprep.subr.mxu0 0.0
        %1974 = vmatpush1.msra.mxu0 0.0
        %1975 = vmatprep.subr.mxu0 0.0
        %1976 = vmatpush1.msra.mxu0 0.0
        %1977 = vmatprep.subr.mxu0 0.0
        %1978 = vmatpush1.msra.mxu0 0.0
        %1979 = vmatprep.subr.mxu0 0.0
        %1980 = vmatpush1.msra.mxu0 0.0
        %1981 = vmatprep.subr.mxu0 0.0
        %1982 = vmatpush1.msra.mxu0 0.0
        %1983 = vmatprep.subr.mxu0 0.0
        %1984 = vmatpush1.msra.mxu0 0.0
        %1985 = vmatprep.subr.mxu0 0.0
        %1986 = vmatpush1.msra.mxu0 0.0
        %1987 = vmatprep.subr.mxu0 0.0
        %1988 = vmatpush1.msra.mxu0 0.0
        %1989 = vmatprep.subr.mxu0 0.0
        %1990 = vmatpush1.msra.mxu0 0.0
        %1991 = vmatprep.subr.mxu0 0.0
        %1992 = vmatpush1.msra.mxu0 0.0
        %1993 = vmatprep.subr.mxu0 0.0
        %1994 = vmatpush1.msra.mxu0 0.0
        %1995 = vmatprep.subr.mxu0 0.0
        %1996 = vmatpush1.msra.mxu0 0.0
        %1997 = vmatprep.mubr.f32.mxu0 0.0
        %1998 = vmatmul.mubr.f32.gmra.mrb[0].mxu0 %v1909
        %v1999 = vpop.f32.mrb[0].mxu0
        %v2000 = vadd.f32 0.0, %v1999
        %v2001 = vpop.f32.mrb[0].mxu0
        %2002 = vmatprep.mubr.f32.mxu0 0.0
        %2003 = vmatmul.mubr.f32.gmra.mrb[0].mxu0 %v1910
        %v2004 = vpop.f32.mrb[0].mxu0
        %v2005 = vadd.f32 0.0, %v2004
        %v2006 = vpop.f32.mrb[0].mxu0
        %2007 = vmatprep.mubr.f32.mxu0 0.0
        %2008 = vmatmul.mubr.f32.gmra.mrb[0].mxu0 %v1911
        %v2009 = vpop.f32.mrb[0].mxu0
        %v2010 = vadd.f32 0.0, %v2009
        %v2011 = vpop.f32.mrb[0].mxu0
        %2012 = vmatprep.mubr.f32.mxu0 0.0
        %2013 = vmatmul.mubr.f32.gmra.mrb[0].mxu0 %v1912
        %v2014 = vpop.f32.mrb[0].mxu0
        %v2015 = vadd.f32 0.0, %v2014
        %v2016 = vpop.f32.mrb[0].mxu0
        %2017 = vmatprep.mubr.f32.mxu0 0.0
        %2018 = vmatmul.mubr.f32.gmra.mrb[0].mxu0 %v1913
        %v2019 = vpop.f32.mrb[0].mxu0
        %v2020 = vadd.f32 0.0, %v2019
        %v2021 = vpop.f32.mrb[0].mxu0
        %2022 = vmatprep.mubr.f32.mxu0 0.0
        %2023 = vmatmul.mubr.f32.gmra.mrb[0].mxu0 %v1914
        %v2024 = vpop.f32.mrb[0].mxu0
        %v2025 = vadd.f32 0.0, %v2024
        %v2026 = vpop.f32.mrb[0].mxu0
        %2027 = vmatprep.mubr.f32.mxu0 0.0
        %2028 = vmatmul.mubr.f32.gmra.mrb[0].mxu0 %v1915
        %v2029 = vpop.f32.mrb[0].mxu0
        %v2030 = vadd.f32 0.0, %v2029
        %v2031 = vpop.f32.mrb[0].mxu0
        %2032 = vmatprep.mubr.f32.mxu0 0.0
        %2033 = vmatmul.mubr.f32.gmra.mrb[0].mxu0 %v1916
        %v2034 = vpop.f32.mrb[0].mxu0
        %v2035 = vadd.f32 0.0, %v2034
        %v2036 = vpop.f32.mrb[0].mxu0
        %2037 = vdwg.mxu0
        %v2038 = vld [vmem:[%s8] sm:$0x1]
        %v2040 = vlaneseq
        %v2041 = vshrl.u32 %v2040, 7
        %v2042 = vsub.s32 0, %v2041
        %v2043 = vrot.slane %v2038, %v2042
        %2045 = vmatprep.subr.mxu0 0.0
        %2046 = vmatpush1.msra.mxu0 %v2000
        %2047 = vmatprep.subr.mxu0 0.0
        %2048 = vmatpush1.msra.mxu0 %v2005
        %2049 = vmatprep.subr.mxu0 0.0
        %2050 = vmatpush1.msra.mxu0 %v2010
        %2051 = vmatprep.subr.mxu0 0.0
        %2052 = vmatpush1.msra.mxu0 %v2015
        %2053 = vmatprep.subr.mxu0 0.0
        %2054 = vmatpush1.msra.mxu0 %v2020
        %2055 = vmatprep.subr.mxu0 0.0
        %2056 = vmatpush1.msra.mxu0 %v2025
        %2057 = vmatprep.subr.mxu0 0.0
        %2058 = vmatpush1.msra.mxu0 %v2030
        %2059 = vmatprep.subr.mxu0 0.0
        %2060 = vmatpush1.msra.mxu0 %v2035
        %2061 = vmatprep.subr.mxu0 0.0
        %2062 = vmatpush1.msra.mxu0 0.0
        %2063 = vmatprep.subr.mxu0 0.0
        %2064 = vmatpush1.msra.mxu0 0.0
        %2065 = vmatprep.subr.mxu0 0.0
        %2066 = vmatpush1.msra.mxu0 0.0
        %2067 = vmatprep.subr.mxu0 0.0
        %2068 = vmatpush1.msra.mxu0 0.0
        %2069 = vmatprep.subr.mxu0 0.0
        %2070 = vmatpush1.msra.mxu0 0.0
        %2071 = vmatprep.subr.mxu0 0.0
        %2072 = vmatpush1.msra.mxu0 0.0
        %2073 = vmatprep.subr.mxu0 0.0
        %2074 = vmatpush1.msra.mxu0 0.0
        %2075 = vmatprep.subr.mxu0 0.0
        %2076 = vmatpush1.msra.mxu0 0.0
        %2077 = vmatprep.subr.mxu0 0.0
        %2078 = vmatpush1.msra.mxu0 0.0
        %2079 = vmatprep.subr.mxu0 0.0
        %2080 = vmatpush1.msra.mxu0 0.0
        %2081 = vmatprep.subr.mxu0 0.0
        %2082 = vmatpush1.msra.mxu0 0.0
        %2083 = vmatprep.subr.mxu0 0.0
        %2084 = vmatpush1.msra.mxu0 0.0
        %2085 = vmatprep.subr.mxu0 0.0
        %2086 = vmatpush1.msra.mxu0 0.0
        %2087 = vmatprep.subr.mxu0 0.0
        %2088 = vmatpush1.msra.mxu0 0.0
        %2089 = vmatprep.subr.mxu0 0.0
        %2090 = vmatpush1.msra.mxu0 0.0
        %2091 = vmatprep.subr.mxu0 0.0
        %2092 = vmatpush1.msra.mxu0 0.0
        %2093 = vmatprep.subr.mxu0 0.0
        %2094 = vmatpush1.msra.mxu0 0.0
        %2095 = vmatprep.subr.mxu0 0.0
        %2096 = vmatpush1.msra.mxu0 0.0
        %2097 = vmatprep.subr.mxu0 0.0
        %2098 = vmatpush1.msra.mxu0 0.0
        %2099 = vmatprep.subr.mxu0 0.0
        %2100 = vmatpush1.msra.mxu0 0.0
        %2101 = vmatprep.subr.mxu0 0.0
        %2102 = vmatpush1.msra.mxu0 0.0
        %2103 = vmatprep.subr.mxu0 0.0
        %2104 = vmatpush1.msra.mxu0 0.0
        %2105 = vmatprep.subr.mxu0 0.0
        %2106 = vmatpush1.msra.mxu0 0.0
        %2107 = vmatprep.subr.mxu0 0.0
        %2108 = vmatpush1.msra.mxu0 0.0
        %2109 = vmatprep.mubr.f32.mxu0 0.0
        %2110 = vmatmul.mubr.f32.gmra.mrb[0].mxu0 %v1508
        %v2111 = vpop.f32.mrb[0].mxu0
        %v2112 = vadd.f32 %v2043, %v2111
        %v2113 = vpop.f32.mrb[0].mxu0
        %2114 = vmatprep.mubr.f32.mxu0 0.0
        %2115 = vmatmul.mubr.f32.gmra.mrb[0].mxu0 %v1511
        %v2116 = vpop.f32.mrb[0].mxu0
        %v2117 = vadd.f32 %v2043, %v2116
        %v2118 = vpop.f32.mrb[0].mxu0
        %2119 = vmatprep.mubr.f32.mxu0 0.0
        %2120 = vmatmul.mubr.f32.gmra.mrb[0].mxu0 %v1514
        %v2121 = vpop.f32.mrb[0].mxu0
        %v2122 = vadd.f32 %v2043, %v2121
        %v2123 = vpop.f32.mrb[0].mxu0
        %2124 = vmatprep.mubr.f32.mxu0 0.0
        %2125 = vmatmul.mubr.f32.gmra.mrb[0].mxu0 %v1517
        %v2126 = vpop.f32.mrb[0].mxu0
        %v2127 = vadd.f32 %v2043, %v2126
        %v2128 = vpop.f32.mrb[0].mxu0
        %2129 = vmatprep.mubr.f32.mxu0 0.0
        %2130 = vmatmul.mubr.f32.gmra.mrb[0].mxu0 %v1520
        %v2131 = vpop.f32.mrb[0].mxu0
        %v2132 = vadd.f32 %v2043, %v2131
        %v2133 = vpop.f32.mrb[0].mxu0
        %2134 = vmatprep.mubr.f32.mxu0 0.0
        %2135 = vmatmul.mubr.f32.gmra.mrb[0].mxu0 %v1523
        %v2136 = vpop.f32.mrb[0].mxu0
        %v2137 = vadd.f32 %v2043, %v2136
        %v2138 = vpop.f32.mrb[0].mxu0
        %2139 = vmatprep.mubr.f32.mxu0 0.0
        %2140 = vmatmul.mubr.f32.gmra.mrb[0].mxu0 %v1526
        %v2141 = vpop.f32.mrb[0].mxu0
        %v2142 = vadd.f32 %v2043, %v2141
        %v2143 = vpop.f32.mrb[0].mxu0
        %2144 = vmatprep.mubr.f32.mxu0 0.0
        %2145 = vmatmul.mubr.f32.gmra.mrb[0].mxu0 %v1529
        %v2146 = vpop.f32.mrb[0].mxu0
        %v2147 = vadd.f32 %v2043, %v2146
        %v2148 = vpop.f32.mrb[0].mxu0
        %2149 = vdwg.mxu0
        %v2150 = vpack.c.bf16 %v2117, %v2112
        %v2151 = vpack.c.bf16 %v2127, %v2122
        %v2152 = vpack.c.bf16 %v2137, %v2132
        %v2153 = vpack.c.bf16 %v2147, %v2142
        %v2158 = vunpack.c.l.b16 %v2150
        %v2159 = vunpack.c.h.b16 %v2150
        %v2160 = vunpack.c.l.b16 %v2151
        %v2161 = vunpack.c.h.b16 %v2151
        %v2162 = vunpack.c.l.b16 %v2152
        %v2163 = vunpack.c.h.b16 %v2152
        %v2164 = vunpack.c.l.b16 %v2153
        %v2165 = vunpack.c.h.b16 %v2153
        %v2166 = vpack.c.b16 %v2158, %v2158
        %v2167 = vpack.c.b16 %v2159, %v2159
        %v2168 = vpack.c.b16 %v2160, %v2160
        %v2169 = vpack.c.b16 %v2161, %v2161
        %v2170 = vpack.c.b16 %v2162, %v2162
        %v2171 = vpack.c.b16 %v2163, %v2163
        %v2172 = vpack.c.b16 %v2164, %v2164
        %v2173 = vpack.c.b16 %v2165, %v2165
        %2182 = vst [vmem:[%s435] sm:$0xf] %v2166
        %2183 = vst [vmem:[%s435 + $0x4] sm:$0xf] %v2167
        %2184 = vst [vmem:[%s435 + $0x8] sm:$0xf] %v2168
        %2185 = vst [vmem:[%s435 + $0xc] sm:$0xf] %v2169
        %2186 = vst [vmem:[%s435 + $0x10] sm:$0xf] %v2170
        %2187 = vst [vmem:[%s435 + $0x14] sm:$0xf] %v2171
        %2188 = vst [vmem:[%s435 + $0x18] sm:$0xf] %v2172
        %2189 = vst [vmem:[%s435 + $0x1c] sm:$0xf] %v2173
        %p2190 = scmp.lt.s32.totalorder %s27, 3
        %s2191 = scalar_select %p2190, %s27, 3
        %s2192 = smul.addr %s2191, 8
        %s2193 = smul.addr %s2192, 4
        %s2194 = scalar_lea.vmem %s9, %s2193
        // Predicated region
        $region77: #{net_forward.1} parent=55 // pred_check
          %p2195 = pneg %p244
        $region78: #{net_forward.1} parent=55 // pred_check_branch
          %2197 = sbr.rel (%p2195) target = $region80
        $region79: #{net_forward.1} parent=55 // pred_region
          _
        $region80: #{net_forward.1} parent=55 // pred_fallthru
          _
      $region56: #{net_forward.1} parent=5 // pred_fallthru
        _
      %p2198 = scmp.le.s32.totalorder 2, %s22
      // Predicated region
      $region81: #{net_forward.1} parent=5 // pred_check
        %p2199 = pneg %p2198
      $region82: #{net_forward.1} parent=5 // pred_check_branch
        %2201 = sbr.rel (%p2199) target = $region84
      $region83: #{net_forward.1} parent=5 // pred_region
        %s2202 = ssub.s32 %s22, 2
        // Predicated region
        $region85: #{net_forward.1} parent=83 // pred_check
          %p2203 = pneg %p250
        $region86: #{net_forward.1} parent=83 // pred_check_branch
          %2205 = sbr.rel (%p2203) target = $region88
        $region87: #{net_forward.1} parent=83 // pred_region
          %p2206 = scmp.lt.s32.totalorder %s28, 3
          %s2207 = scalar_select %p2206, %s28, 3
          %s2208 = smul.addr %s2207, 8
          %s2209 = smul.addr %s2208, 4
          %s2210 = scalar_lea.vmem %s9, %s2209
        $region88: #{net_forward.1} parent=83 // pred_fallthru
          _
      $region84: #{net_forward.1} parent=5 // pred_fallthru
        _
    $region6: #{net_forward.1} parent=1 // loop_footer
      %s26 = sadd.s32 1, %s22
    $region7: #{net_forward.1} parent=1 // loop_footer_branch
      %21 = sbr.rel target = $region3
    $region8: #{net_forward.1} parent=1 // loop_exit
      _
    %2211 = vsyncpa [#allocation3], 1
    %s2212 = scalar_lea.sflag [#allocation3], 1
    %2213 = vsyncpa %s2212, 1
    %2214 = vsyncpa [#allocation5], 1
    %s2215 = scalar_lea.sflag [#allocation5], 1
    %2216 = vsyncpa %s2215, 1
    %2217 = vsyncpa [#allocation8], 1

</llo_original>
